<compile_context>
chip_gen: v7x
topology: tpu7x:2x2x1
jax: 0.10.0
libtpu: 0.0.40
codegen_flags: <defaults>
</compile_context>

<pallas_src>
import jax
import jax.numpy as jnp
from jax import lax
import numpy as np
from jax.experimental import pallas as pl
from jax.experimental.pallas import tpu as pltpu

T = 8          # number of timesteps (rows after x.view(-1, 8))
D = 8          # input_dim
H = 128        # hidden_dim
C = 5          # output classes
G = 4 * H      # packed gate width (512)
OUT_PAD = 128  # lane-dense padded output width
EPS = 1e-5     # BatchNorm eps (PyTorch default)
NEG = -1e30    # padded-logit bias (drives exp() to 0 in log_softmax)

# Packed-parameter row offsets --------------------------------------------
# big (137, 512):
_WIH_R0 = 0            # rows [0, D)    : W_ih^T  (D, 4H), gate order (i,f,o,g)
_WHH_R0 = D            # rows [D, D+H)  : W_hh^T  (H, 4H)
_BG_R0 = D + H         # row  D+H       : fused gate bias b_ih + b_hh  (1, 4H)
# pk (133, 128):
_WOUT_R0 = 0           # rows [0, H)    : W_out^T zero-padded to (H, 128)
_GIN_R = H             # row H          : in_norm gamma   (lanes [0, D))
_BIN_R = H + 1         # row H+1        : in_norm beta    (lanes [0, D))
_GLS_R = H + 2         # row H+2        : lstm_norm gamma (lanes [0, H))
_BLS_R = H + 3         # row H+3        : lstm_norm beta  (lanes [0, H))
_BOUT_R = H + 4        # row H+4        : out bias, padded lanes = NEG


def net_kernel(x_ref, big_ref, pk_ref, o_ref):
    # ---- in_norm: BatchNorm1d(8) over batch (axis 0), training-mode stats ----
    x = x_ref[...]
    gin = pk_ref[_GIN_R:_GIN_R + 1, :D]
    bin_ = pk_ref[_BIN_R:_BIN_R + 1, :D]
    mu = jnp.mean(x, axis=0, keepdims=True)
    var = jnp.mean((x - mu) ** 2, axis=0, keepdims=True)
    xn = (x - mu) * lax.rsqrt(var + EPS) * gin + bin_

    # ---- input projection for all timesteps in one matmul: (T,D)@(D,4H) ----
    # Kept as a register value (8x512 f32 = 4 vregs); no VMEM scratch.
    xg = (jnp.dot(xn, big_ref[_WIH_R0:_WIH_R0 + D, :],
                  preferred_element_type=jnp.float32)
          + big_ref[_BG_R0:_BG_R0 + 1, :])

    # Loop-invariant recurrent weight, loaded once (f32 kept for accuracy).
    whh = big_ref[_WHH_R0:_WHH_R0 + H, :]

    # ---- LSTM recurrence, fully unrolled (T=8), gate order (i, f, o, g) ----
    # TODO(synk): the module only ever runs one sequence per forward (batch=1
    # LSTM); batching multiple sequences onto the sublane axis would be the
    # big throughput lever but changes the call contract.
    h = jnp.zeros((1, H), jnp.float32)
    c = jnp.zeros((1, H), jnp.float32)
    hs = []
    for t in range(T):  # static unroll: T is a compile-time constant
        gates = xg[t:t + 1, :] + jnp.dot(h, whh,
                                         preferred_element_type=jnp.float32)
        # sigmoid(z) = 0.5*tanh(0.5*z) + 0.5 : one EUP issue per vreg over the
        # fused contiguous i|f|o region instead of exp + reciprocal.
        sig = 0.5 * jnp.tanh(0.5 * gates[:, 0:3 * H]) + 0.5
        g_g = jnp.tanh(gates[:, 3 * H:4 * H])
        i_g = sig[:, 0 * H:1 * H]
        f_g = sig[:, 1 * H:2 * H]
        o_g = sig[:, 2 * H:3 * H]
        c = f_g * c + i_g * g_g
        h = o_g * jnp.tanh(c)
        hs.append(h)

    # ---- relu -> lstm_norm (BatchNorm1d over batch, training-mode stats) ----
    hr = jnp.maximum(jnp.concatenate(hs, axis=0), 0.0)   # (T, H)
    mu2 = jnp.mean(hr, axis=0, keepdims=True)
    var2 = jnp.mean((hr - mu2) ** 2, axis=0, keepdims=True)
    gls = pk_ref[_GLS_R:_GLS_R + 1, :]
    bls = pk_ref[_BLS_R:_BLS_R + 1, :]
    hn = (hr - mu2) * lax.rsqrt(var2 + EPS) * gls + bls

    # ---- out: Linear(128,5) padded to 128 lanes + log_softmax(dim=1) ----
    # Padded weight columns are 0 and padded bias is -1e30, so padded logits
    # contribute exp(-inf)=0 to the denominator; wrapper slices [:, :5].
    logits = (jnp.dot(hn, pk_ref[_WOUT_R0:_WOUT_R0 + H, :],
                      preferred_element_type=jnp.float32)
              + pk_ref[_BOUT_R:_BOUT_R + 1, :])
    m = jnp.max(logits, axis=1, keepdims=True)
    lse = jnp.log(jnp.sum(jnp.exp(logits - m), axis=1, keepdims=True)) + m
    o_ref[...] = logits - lse   # full unmasked lane-dense (8,128) store


def net_forward(x, kparams):
    big, pk = kparams
    vmem = pl.BlockSpec(memory_space=pltpu.MemorySpace.VMEM)
    out = pl.pallas_call(
        net_kernel,
        out_shape=jax.ShapeDtypeStruct((T, OUT_PAD), jnp.float32),
        in_specs=[vmem, vmem, vmem],
        out_specs=vmem,
    )(x, big, pk)
    return out[:, :C]
    # TODO(synk): if this is called once per agent step, a leading grid axis /
    # cross-call prefetch would keep whh resident in VMEM across invocations.


def make_torch_params(key):
    """Raw parameters in PyTorch layout (gate order i,f,g,o)."""
    ks = jax.random.split(key, 6)
    s = 1.0 / np.sqrt(H)
    w_ih = jax.random.uniform(ks[0], (4 * H, D), jnp.float32, -s, s)
    w_hh = jax.random.uniform(ks[1], (4 * H, H), jnp.float32, -s, s)
    b_ih = jax.random.uniform(ks[2], (4 * H,), jnp.float32, -s, s)
    b_hh = jax.random.uniform(ks[3], (4 * H,), jnp.float32, -s, s)
    w_out = jax.random.uniform(ks[4], (C, H), jnp.float32, -s, s)
    b_out = jax.random.uniform(ks[5], (C,), jnp.float32, -s, s)
    gin = jnp.ones((D,), jnp.float32)
    bin_ = jnp.zeros((D,), jnp.float32)
    gls = jnp.ones((H,), jnp.float32)
    bls = jnp.zeros((H,), jnp.float32)
    return (gin, bin_, w_ih, w_hh, b_ih, b_hh, gls, bls, w_out, b_out)


def make_kernel_params(tp):
    """Pack all parameters into 2 pre-padded arrays (gate order -> i,f,o,g)."""
    (gin, bin_, w_ih, w_hh, b_ih, b_hh, gls, bls, w_out, b_out) = tp
    # PyTorch packs gate rows as i,f,g,o; reorder to i,f,o,g so sigmoid gates
    # occupy one contiguous (1, 3H) slice in the kernel.
    perm = np.concatenate([np.arange(0, 2 * H),
                           np.arange(3 * H, 4 * H),
                           np.arange(2 * H, 3 * H)])
    wih_t = jnp.transpose(w_ih[perm])                    # (D, 4H)
    whh_t = jnp.transpose(w_hh[perm])                    # (H, 4H)
    bg = (b_ih + b_hh)[perm].reshape(1, 4 * H)           # fused gate bias
    big = jnp.concatenate([wih_t, whh_t, bg], axis=0)    # (D+H+1, 4H) = (137, 512)

    wout_pad = jnp.zeros((H, OUT_PAD), jnp.float32).at[:, :C].set(jnp.transpose(w_out))
    bout_pad = jnp.full((1, OUT_PAD), NEG, jnp.float32).at[0, :C].set(b_out)

    def row128(v):
        return jnp.zeros((1, OUT_PAD), jnp.float32).at[0, :v.shape[0]].set(v)

    pk = jnp.concatenate([wout_pad, row128(gin), row128(bin_),
                          gls.reshape(1, H), bls.reshape(1, H), bout_pad],
                         axis=0)                          # (H+5, 128) = (133, 128)
    return big, pk


def ref_forward(x, tp):
    """Pure-JAX reference replicating the PyTorch forward (training-mode BN,
    standard i,f,g,o gate layout)."""
    (gin, bin_, w_ih, w_hh, b_ih, b_hh, gls, bls, w_out, b_out) = tp
    mu = jnp.mean(x, axis=0, keepdims=True)
    var = jnp.mean((x - mu) ** 2, axis=0, keepdims=True)
    xn = (x - mu) / jnp.sqrt(var + EPS) * gin + bin_
    xg = xn @ w_ih.T + b_ih + b_hh
    h = jnp.zeros((1, H), jnp.float32)
    c = jnp.zeros((1, H), jnp.float32)
    hs = []
    for t in range(T):
        gates = xg[t:t + 1] + h @ w_hh.T
        i_g = jax.nn.sigmoid(gates[:, 0 * H:1 * H])
        f_g = jax.nn.sigmoid(gates[:, 1 * H:2 * H])
        g_g = jnp.tanh(gates[:, 2 * H:3 * H])
        o_g = jax.nn.sigmoid(gates[:, 3 * H:4 * H])
        c = f_g * c + i_g * g_g
        h = o_g * jnp.tanh(c)
        hs.append(h)
    hr = jnp.maximum(jnp.concatenate(hs, axis=0), 0.0)
    mu2 = jnp.mean(hr, axis=0, keepdims=True)
    var2 = jnp.mean((hr - mu2) ** 2, axis=0, keepdims=True)
    hn = (hr - mu2) / jnp.sqrt(var2 + EPS) * gls + bls
    logits = hn @ w_out.T + b_out
    return jax.nn.log_softmax(logits, axis=1)


if __name__ == "__main__":
    key = jax.random.PRNGKey(0)
    kx, kp = jax.random.split(key)
    x = jax.random.normal(kx, (T, D), jnp.float32)   # viewable to (-1, 8)

    torch_params = make_torch_params(kp)
    kernel_params = make_kernel_params(torch_params)

    out = net_forward(x, kernel_params)
    out = jax.block_until_ready(out)

    ref = jax.block_until_ready(ref_forward(x, torch_params))
    assert out.shape == (T, C)
    assert np.allclose(np.asarray(out), np.asarray(ref), atol=1e-3, rtol=1e-3), \
        "Pallas output does not match JAX reference"

    # TODO(synk): the module's persistent self.hidden across forward calls and
    # BatchNorm running-stat updates are host-side state, not expressed here.
    print("KERNEL_OK")
</pallas_src>

<mosaic_0001>
module attributes {stable_mosaic.version = 11 : i64} {
  func.func @net_kernel(%arg0: memref<8x8xf32, #tpu.memory_space<vmem>>, %arg1: memref<137x512xf32, #tpu.memory_space<vmem>>, %arg2: memref<133x128xf32, #tpu.memory_space<vmem>>, %arg3: memref<8x128xf32, #tpu.memory_space<vmem>>) attributes {dimension_semantics = [], scalar_prefetch = 0 : i64, scratch_operands = 0 : i64, tpu.core_type = #tpu.core_type<tc>} {
    %c0 = arith.constant 0 : index
    %c0_0 = arith.constant 0 : index
    %0 = vector.load %arg0[%c0, %c0_0] : memref<8x8xf32, #tpu.memory_space<vmem>>, vector<8x8xf32>
    %c128 = arith.constant 128 : index
    %c0_1 = arith.constant 0 : index
    %1 = vector.load %arg2[%c128, %c0_1] : memref<133x128xf32, #tpu.memory_space<vmem>>, vector<1x8xf32>
    %c129 = arith.constant 129 : index
    %c0_2 = arith.constant 0 : index
    %2 = vector.load %arg2[%c129, %c0_2] : memref<133x128xf32, #tpu.memory_space<vmem>>, vector<1x8xf32>
    %cst = arith.constant dense<0.000000e+00> : vector<8xf32>
    %3 = vector.multi_reduction <add>, %0, %cst [0] : vector<8x8xf32> to vector<8xf32>
    %4 = vector.shape_cast %3 : vector<8xf32> to vector<1x8xf32>
    %cst_3 = arith.constant 8.000000e+00 : f32
    %5 = vector.broadcast %cst_3 : f32 to vector<1x8xf32>
    %6 = arith.divf %4, %5 : vector<1x8xf32>
    %7 = vector.broadcast %6 : vector<1x8xf32> to vector<8x8xf32>
    %8 = arith.subf %0, %7 : vector<8x8xf32>
    %9 = arith.mulf %8, %8 : vector<8x8xf32>
    %cst_4 = arith.constant dense<0.000000e+00> : vector<8xf32>
    %10 = vector.multi_reduction <add>, %9, %cst_4 [0] : vector<8x8xf32> to vector<8xf32>
    %11 = vector.shape_cast %10 : vector<8xf32> to vector<1x8xf32>
    %cst_5 = arith.constant 8.000000e+00 : f32
    %12 = vector.broadcast %cst_5 : f32 to vector<1x8xf32>
    %13 = arith.divf %11, %12 : vector<1x8xf32>
    %14 = vector.broadcast %6 : vector<1x8xf32> to vector<8x8xf32>
    %15 = arith.subf %0, %14 : vector<8x8xf32>
    %cst_6 = arith.constant 9.99999974E-6 : f32
    %16 = vector.broadcast %cst_6 : f32 to vector<1x8xf32>
    %17 = arith.addf %13, %16 : vector<1x8xf32>
    %18 = math.rsqrt %17 : vector<1x8xf32>
    %19 = vector.broadcast %18 : vector<1x8xf32> to vector<8x8xf32>
    %20 = arith.mulf %15, %19 : vector<8x8xf32>
    %21 = vector.broadcast %1 : vector<1x8xf32> to vector<8x8xf32>
    %22 = arith.mulf %20, %21 : vector<8x8xf32>
    %23 = vector.broadcast %2 : vector<1x8xf32> to vector<8x8xf32>
    %24 = arith.addf %22, %23 : vector<8x8xf32>
    %c0_7 = arith.constant 0 : index
    %c0_8 = arith.constant 0 : index
    %25 = vector.load %arg1[%c0_7, %c0_8] : memref<137x512xf32, #tpu.memory_space<vmem>>, vector<8x512xf32>
    %cst_9 = arith.constant dense<0.000000e+00> : vector<8x512xf32>
    %26 = tpu.matmul %24, %25, %cst_9 {dimension_numbers = #tpu.dot_dimension_numbers<[1], [0], [0], [1], [0, 0, 1, 1], [], []>} : vector<8x8xf32>, vector<8x512xf32>, vector<8x512xf32> -> vector<8x512xf32>
    %c136 = arith.constant 136 : index
    %c0_10 = arith.constant 0 : index
    %27 = vector.load %arg1[%c136, %c0_10] : memref<137x512xf32, #tpu.memory_space<vmem>>, vector<1x512xf32>
    %28 = vector.broadcast %27 : vector<1x512xf32> to vector<8x512xf32>
    %29 = arith.addf %26, %28 : vector<8x512xf32>
    %c8 = arith.constant 8 : index
    %c0_11 = arith.constant 0 : index
    %30 = vector.load %arg1[%c8, %c0_11] : memref<137x512xf32, #tpu.memory_space<vmem>>, vector<128x512xf32>
    %cst_12 = arith.constant 0.000000e+00 : f32
    %31 = vector.broadcast %cst_12 : f32 to vector<1x128xf32>
    %cst_13 = arith.constant 0.000000e+00 : f32
    %32 = vector.broadcast %cst_13 : f32 to vector<1x128xf32>
    %33 = vector.extract_strided_slice %29 {offsets = [0, 0], sizes = [1, 512], strides = [1, 1]} : vector<8x512xf32> to vector<1x512xf32>
    %cst_14 = arith.constant dense<0.000000e+00> : vector<1x512xf32>
    %34 = tpu.matmul %31, %30, %cst_14 {dimension_numbers = #tpu.dot_dimension_numbers<[1], [0], [0], [1], [0, 0, 1, 1], [], []>} : vector<1x128xf32>, vector<128x512xf32>, vector<1x512xf32> -> vector<1x512xf32>
    %35 = arith.addf %33, %34 : vector<1x512xf32>
    %36 = vector.extract_strided_slice %35 {offsets = [0, 0], sizes = [1, 384], strides = [1, 1]} : vector<1x512xf32> to vector<1x384xf32>
    %cst_15 = arith.constant 5.000000e-01 : f32
    %37 = vector.broadcast %cst_15 : f32 to vector<1x384xf32>
    %38 = arith.mulf %37, %36 : vector<1x384xf32>
    %39 = math.tanh %38 : vector<1x384xf32>
    %cst_16 = arith.constant 5.000000e-01 : f32
    %40 = vector.broadcast %cst_16 : f32 to vector<1x384xf32>
    %41 = arith.mulf %40, %39 : vector<1x384xf32>
    %cst_17 = arith.constant 5.000000e-01 : f32
    %42 = vector.broadcast %cst_17 : f32 to vector<1x384xf32>
    %43 = arith.addf %41, %42 : vector<1x384xf32>
    %44 = vector.extract_strided_slice %35 {offsets = [0, 384], sizes = [1, 128], strides = [1, 1]} : vector<1x512xf32> to vector<1x128xf32>
    %45 = math.tanh %44 : vector<1x128xf32>
    %46 = vector.extract_strided_slice %43 {offsets = [0, 0], sizes = [1, 128], strides = [1, 1]} : vector<1x384xf32> to vector<1x128xf32>
    %47 = vector.extract_strided_slice %43 {offsets = [0, 128], sizes = [1, 128], strides = [1, 1]} : vector<1x384xf32> to vector<1x128xf32>
    %48 = vector.extract_strided_slice %43 {offsets = [0, 256], sizes = [1, 128], strides = [1, 1]} : vector<1x384xf32> to vector<1x128xf32>
    %49 = arith.mulf %47, %32 : vector<1x128xf32>
    %50 = arith.mulf %46, %45 : vector<1x128xf32>
    %51 = arith.addf %49, %50 : vector<1x128xf32>
    %52 = math.tanh %51 : vector<1x128xf32>
    %53 = arith.mulf %48, %52 : vector<1x128xf32>
    %54 = vector.extract_strided_slice %29 {offsets = [1, 0], sizes = [1, 512], strides = [1, 1]} : vector<8x512xf32> to vector<1x512xf32>
    %cst_18 = arith.constant dense<0.000000e+00> : vector<1x512xf32>
    %55 = tpu.matmul %53, %30, %cst_18 {dimension_numbers = #tpu.dot_dimension_numbers<[1], [0], [0], [1], [0, 0, 1, 1], [], []>} : vector<1x128xf32>, vector<128x512xf32>, vector<1x512xf32> -> vector<1x512xf32>
    %56 = arith.addf %54, %55 : vector<1x512xf32>
    %57 = vector.extract_strided_slice %56 {offsets = [0, 0], sizes = [1, 384], strides = [1, 1]} : vector<1x512xf32> to vector<1x384xf32>
    %cst_19 = arith.constant 5.000000e-01 : f32
    %58 = vector.broadcast %cst_19 : f32 to vector<1x384xf32>
    %59 = arith.mulf %58, %57 : vector<1x384xf32>
    %60 = math.tanh %59 : vector<1x384xf32>
    %cst_20 = arith.constant 5.000000e-01 : f32
    %61 = vector.broadcast %cst_20 : f32 to vector<1x384xf32>
    %62 = arith.mulf %61, %60 : vector<1x384xf32>
    %cst_21 = arith.constant 5.000000e-01 : f32
    %63 = vector.broadcast %cst_21 : f32 to vector<1x384xf32>
    %64 = arith.addf %62, %63 : vector<1x384xf32>
    %65 = vector.extract_strided_slice %56 {offsets = [0, 384], sizes = [1, 128], strides = [1, 1]} : vector<1x512xf32> to vector<1x128xf32>
    %66 = math.tanh %65 : vector<1x128xf32>
    %67 = vector.extract_strided_slice %64 {offsets = [0, 0], sizes = [1, 128], strides = [1, 1]} : vector<1x384xf32> to vector<1x128xf32>
    %68 = vector.extract_strided_slice %64 {offsets = [0, 128], sizes = [1, 128], strides = [1, 1]} : vector<1x384xf32> to vector<1x128xf32>
    %69 = vector.extract_strided_slice %64 {offsets = [0, 256], sizes = [1, 128], strides = [1, 1]} : vector<1x384xf32> to vector<1x128xf32>
    %70 = arith.mulf %68, %51 : vector<1x128xf32>
    %71 = arith.mulf %67, %66 : vector<1x128xf32>
    %72 = arith.addf %70, %71 : vector<1x128xf32>
    %73 = math.tanh %72 : vector<1x128xf32>
    %74 = arith.mulf %69, %73 : vector<1x128xf32>
    %75 = vector.extract_strided_slice %29 {offsets = [2, 0], sizes = [1, 512], strides = [1, 1]} : vector<8x512xf32> to vector<1x512xf32>
    %cst_22 = arith.constant dense<0.000000e+00> : vector<1x512xf32>
    %76 = tpu.matmul %74, %30, %cst_22 {dimension_numbers = #tpu.dot_dimension_numbers<[1], [0], [0], [1], [0, 0, 1, 1], [], []>} : vector<1x128xf32>, vector<128x512xf32>, vector<1x512xf32> -> vector<1x512xf32>
    %77 = arith.addf %75, %76 : vector<1x512xf32>
    %78 = vector.extract_strided_slice %77 {offsets = [0, 0], sizes = [1, 384], strides = [1, 1]} : vector<1x512xf32> to vector<1x384xf32>
    %cst_23 = arith.constant 5.000000e-01 : f32
    %79 = vector.broadcast %cst_23 : f32 to vector<1x384xf32>
    %80 = arith.mulf %79, %78 : vector<1x384xf32>
    %81 = math.tanh %80 : vector<1x384xf32>
    %cst_24 = arith.constant 5.000000e-01 : f32
    %82 = vector.broadcast %cst_24 : f32 to vector<1x384xf32>
    %83 = arith.mulf %82, %81 : vector<1x384xf32>
    %cst_25 = arith.constant 5.000000e-01 : f32
    %84 = vector.broadcast %cst_25 : f32 to vector<1x384xf32>
    %85 = arith.addf %83, %84 : vector<1x384xf32>
    %86 = vector.extract_strided_slice %77 {offsets = [0, 384], sizes = [1, 128], strides = [1, 1]} : vector<1x512xf32> to vector<1x128xf32>
    %87 = math.tanh %86 : vector<1x128xf32>
    %88 = vector.extract_strided_slice %85 {offsets = [0, 0], sizes = [1, 128], strides = [1, 1]} : vector<1x384xf32> to vector<1x128xf32>
    %89 = vector.extract_strided_slice %85 {offsets = [0, 128], sizes = [1, 128], strides = [1, 1]} : vector<1x384xf32> to vector<1x128xf32>
    %90 = vector.extract_strided_slice %85 {offsets = [0, 256], sizes = [1, 128], strides = [1, 1]} : vector<1x384xf32> to vector<1x128xf32>
    %91 = arith.mulf %89, %72 : vector<1x128xf32>
    %92 = arith.mulf %88, %87 : vector<1x128xf32>
    %93 = arith.addf %91, %92 : vector<1x128xf32>
    %94 = math.tanh %93 : vector<1x128xf32>
    %95 = arith.mulf %90, %94 : vector<1x128xf32>
    %96 = vector.extract_strided_slice %29 {offsets = [3, 0], sizes = [1, 512], strides = [1, 1]} : vector<8x512xf32> to vector<1x512xf32>
    %cst_26 = arith.constant dense<0.000000e+00> : vector<1x512xf32>
    %97 = tpu.matmul %95, %30, %cst_26 {dimension_numbers = #tpu.dot_dimension_numbers<[1], [0], [0], [1], [0, 0, 1, 1], [], []>} : vector<1x128xf32>, vector<128x512xf32>, vector<1x512xf32> -> vector<1x512xf32>
    %98 = arith.addf %96, %97 : vector<1x512xf32>
    %99 = vector.extract_strided_slice %98 {offsets = [0, 0], sizes = [1, 384], strides = [1, 1]} : vector<1x512xf32> to vector<1x384xf32>
    %cst_27 = arith.constant 5.000000e-01 : f32
    %100 = vector.broadcast %cst_27 : f32 to vector<1x384xf32>
    %101 = arith.mulf %100, %99 : vector<1x384xf32>
    %102 = math.tanh %101 : vector<1x384xf32>
    %cst_28 = arith.constant 5.000000e-01 : f32
    %103 = vector.broadcast %cst_28 : f32 to vector<1x384xf32>
    %104 = arith.mulf %103, %102 : vector<1x384xf32>
    %cst_29 = arith.constant 5.000000e-01 : f32
    %105 = vector.broadcast %cst_29 : f32 to vector<1x384xf32>
    %106 = arith.addf %104, %105 : vector<1x384xf32>
    %107 = vector.extract_strided_slice %98 {offsets = [0, 384], sizes = [1, 128], strides = [1, 1]} : vector<1x512xf32> to vector<1x128xf32>
    %108 = math.tanh %107 : vector<1x128xf32>
    %109 = vector.extract_strided_slice %106 {offsets = [0, 0], sizes = [1, 128], strides = [1, 1]} : vector<1x384xf32> to vector<1x128xf32>
    %110 = vector.extract_strided_slice %106 {offsets = [0, 128], sizes = [1, 128], strides = [1, 1]} : vector<1x384xf32> to vector<1x128xf32>
    %111 = vector.extract_strided_slice %106 {offsets = [0, 256], sizes = [1, 128], strides = [1, 1]} : vector<1x384xf32> to vector<1x128xf32>
    %112 = arith.mulf %110, %93 : vector<1x128xf32>
    %113 = arith.mulf %109, %108 : vector<1x128xf32>
    %114 = arith.addf %112, %113 : vector<1x128xf32>
    %115 = math.tanh %114 : vector<1x128xf32>
    %116 = arith.mulf %111, %115 : vector<1x128xf32>
    %117 = vector.extract_strided_slice %29 {offsets = [4, 0], sizes = [1, 512], strides = [1, 1]} : vector<8x512xf32> to vector<1x512xf32>
    %cst_30 = arith.constant dense<0.000000e+00> : vector<1x512xf32>
    %118 = tpu.matmul %116, %30, %cst_30 {dimension_numbers = #tpu.dot_dimension_numbers<[1], [0], [0], [1], [0, 0, 1, 1], [], []>} : vector<1x128xf32>, vector<128x512xf32>, vector<1x512xf32> -> vector<1x512xf32>
    %119 = arith.addf %117, %118 : vector<1x512xf32>
    %120 = vector.extract_strided_slice %119 {offsets = [0, 0], sizes = [1, 384], strides = [1, 1]} : vector<1x512xf32> to vector<1x384xf32>
    %cst_31 = arith.constant 5.000000e-01 : f32
    %121 = vector.broadcast %cst_31 : f32 to vector<1x384xf32>
    %122 = arith.mulf %121, %120 : vector<1x384xf32>
    %123 = math.tanh %122 : vector<1x384xf32>
    %cst_32 = arith.constant 5.000000e-01 : f32
    %124 = vector.broadcast %cst_32 : f32 to vector<1x384xf32>
    %125 = arith.mulf %124, %123 : vector<1x384xf32>
    %cst_33 = arith.constant 5.000000e-01 : f32
    %126 = vector.broadcast %cst_33 : f32 to vector<1x384xf32>
    %127 = arith.addf %125, %126 : vector<1x384xf32>
    %128 = vector.extract_strided_slice %119 {offsets = [0, 384], sizes = [1, 128], strides = [1, 1]} : vector<1x512xf32> to vector<1x128xf32>
    %129 = math.tanh %128 : vector<1x128xf32>
    %130 = vector.extract_strided_slice %127 {offsets = [0, 0], sizes = [1, 128], strides = [1, 1]} : vector<1x384xf32> to vector<1x128xf32>
    %131 = vector.extract_strided_slice %127 {offsets = [0, 128], sizes = [1, 128], strides = [1, 1]} : vector<1x384xf32> to vector<1x128xf32>
    %132 = vector.extract_strided_slice %127 {offsets = [0, 256], sizes = [1, 128], strides = [1, 1]} : vector<1x384xf32> to vector<1x128xf32>
    %133 = arith.mulf %131, %114 : vector<1x128xf32>
    %134 = arith.mulf %130, %129 : vector<1x128xf32>
    %135 = arith.addf %133, %134 : vector<1x128xf32>
    %136 = math.tanh %135 : vector<1x128xf32>
    %137 = arith.mulf %132, %136 : vector<1x128xf32>
    %138 = vector.extract_strided_slice %29 {offsets = [5, 0], sizes = [1, 512], strides = [1, 1]} : vector<8x512xf32> to vector<1x512xf32>
    %cst_34 = arith.constant dense<0.000000e+00> : vector<1x512xf32>
    %139 = tpu.matmul %137, %30, %cst_34 {dimension_numbers = #tpu.dot_dimension_numbers<[1], [0], [0], [1], [0, 0, 1, 1], [], []>} : vector<1x128xf32>, vector<128x512xf32>, vector<1x512xf32> -> vector<1x512xf32>
    %140 = arith.addf %138, %139 : vector<1x512xf32>
    %141 = vector.extract_strided_slice %140 {offsets = [0, 0], sizes = [1, 384], strides = [1, 1]} : vector<1x512xf32> to vector<1x384xf32>
    %cst_35 = arith.constant 5.000000e-01 : f32
    %142 = vector.broadcast %cst_35 : f32 to vector<1x384xf32>
    %143 = arith.mulf %142, %141 : vector<1x384xf32>
    %144 = math.tanh %143 : vector<1x384xf32>
    %cst_36 = arith.constant 5.000000e-01 : f32
    %145 = vector.broadcast %cst_36 : f32 to vector<1x384xf32>
    %146 = arith.mulf %145, %144 : vector<1x384xf32>
    %cst_37 = arith.constant 5.000000e-01 : f32
    %147 = vector.broadcast %cst_37 : f32 to vector<1x384xf32>
    %148 = arith.addf %146, %147 : vector<1x384xf32>
    %149 = vector.extract_strided_slice %140 {offsets = [0, 384], sizes = [1, 128], strides = [1, 1]} : vector<1x512xf32> to vector<1x128xf32>
    %150 = math.tanh %149 : vector<1x128xf32>
    %151 = vector.extract_strided_slice %148 {offsets = [0, 0], sizes = [1, 128], strides = [1, 1]} : vector<1x384xf32> to vector<1x128xf32>
    %152 = vector.extract_strided_slice %148 {offsets = [0, 128], sizes = [1, 128], strides = [1, 1]} : vector<1x384xf32> to vector<1x128xf32>
    %153 = vector.extract_strided_slice %148 {offsets = [0, 256], sizes = [1, 128], strides = [1, 1]} : vector<1x384xf32> to vector<1x128xf32>
    %154 = arith.mulf %152, %135 : vector<1x128xf32>
    %155 = arith.mulf %151, %150 : vector<1x128xf32>
    %156 = arith.addf %154, %155 : vector<1x128xf32>
    %157 = math.tanh %156 : vector<1x128xf32>
    %158 = arith.mulf %153, %157 : vector<1x128xf32>
    %159 = vector.extract_strided_slice %29 {offsets = [6, 0], sizes = [1, 512], strides = [1, 1]} : vector<8x512xf32> to vector<1x512xf32>
    %cst_38 = arith.constant dense<0.000000e+00> : vector<1x512xf32>
    %160 = tpu.matmul %158, %30, %cst_38 {dimension_numbers = #tpu.dot_dimension_numbers<[1], [0], [0], [1], [0, 0, 1, 1], [], []>} : vector<1x128xf32>, vector<128x512xf32>, vector<1x512xf32> -> vector<1x512xf32>
    %161 = arith.addf %159, %160 : vector<1x512xf32>
    %162 = vector.extract_strided_slice %161 {offsets = [0, 0], sizes = [1, 384], strides = [1, 1]} : vector<1x512xf32> to vector<1x384xf32>
    %cst_39 = arith.constant 5.000000e-01 : f32
    %163 = vector.broadcast %cst_39 : f32 to vector<1x384xf32>
    %164 = arith.mulf %163, %162 : vector<1x384xf32>
    %165 = math.tanh %164 : vector<1x384xf32>
    %cst_40 = arith.constant 5.000000e-01 : f32
    %166 = vector.broadcast %cst_40 : f32 to vector<1x384xf32>
    %167 = arith.mulf %166, %165 : vector<1x384xf32>
    %cst_41 = arith.constant 5.000000e-01 : f32
    %168 = vector.broadcast %cst_41 : f32 to vector<1x384xf32>
    %169 = arith.addf %167, %168 : vector<1x384xf32>
    %170 = vector.extract_strided_slice %161 {offsets = [0, 384], sizes = [1, 128], strides = [1, 1]} : vector<1x512xf32> to vector<1x128xf32>
    %171 = math.tanh %170 : vector<1x128xf32>
    %172 = vector.extract_strided_slice %169 {offsets = [0, 0], sizes = [1, 128], strides = [1, 1]} : vector<1x384xf32> to vector<1x128xf32>
    %173 = vector.extract_strided_slice %169 {offsets = [0, 128], sizes = [1, 128], strides = [1, 1]} : vector<1x384xf32> to vector<1x128xf32>
    %174 = vector.extract_strided_slice %169 {offsets = [0, 256], sizes = [1, 128], strides = [1, 1]} : vector<1x384xf32> to vector<1x128xf32>
    %175 = arith.mulf %173, %156 : vector<1x128xf32>
    %176 = arith.mulf %172, %171 : vector<1x128xf32>
    %177 = arith.addf %175, %176 : vector<1x128xf32>
    %178 = math.tanh %177 : vector<1x128xf32>
    %179 = arith.mulf %174, %178 : vector<1x128xf32>
    %180 = vector.extract_strided_slice %29 {offsets = [7, 0], sizes = [1, 512], strides = [1, 1]} : vector<8x512xf32> to vector<1x512xf32>
    %cst_42 = arith.constant dense<0.000000e+00> : vector<1x512xf32>
    %181 = tpu.matmul %179, %30, %cst_42 {dimension_numbers = #tpu.dot_dimension_numbers<[1], [0], [0], [1], [0, 0, 1, 1], [], []>} : vector<1x128xf32>, vector<128x512xf32>, vector<1x512xf32> -> vector<1x512xf32>
    %182 = arith.addf %180, %181 : vector<1x512xf32>
    %183 = vector.extract_strided_slice %182 {offsets = [0, 0], sizes = [1, 384], strides = [1, 1]} : vector<1x512xf32> to vector<1x384xf32>
    %cst_43 = arith.constant 5.000000e-01 : f32
    %184 = vector.broadcast %cst_43 : f32 to vector<1x384xf32>
    %185 = arith.mulf %184, %183 : vector<1x384xf32>
    %186 = math.tanh %185 : vector<1x384xf32>
    %cst_44 = arith.constant 5.000000e-01 : f32
    %187 = vector.broadcast %cst_44 : f32 to vector<1x384xf32>
    %188 = arith.mulf %187, %186 : vector<1x384xf32>
    %cst_45 = arith.constant 5.000000e-01 : f32
    %189 = vector.broadcast %cst_45 : f32 to vector<1x384xf32>
    %190 = arith.addf %188, %189 : vector<1x384xf32>
    %191 = vector.extract_strided_slice %182 {offsets = [0, 384], sizes = [1, 128], strides = [1, 1]} : vector<1x512xf32> to vector<1x128xf32>
    %192 = math.tanh %191 : vector<1x128xf32>
    %193 = vector.extract_strided_slice %190 {offsets = [0, 0], sizes = [1, 128], strides = [1, 1]} : vector<1x384xf32> to vector<1x128xf32>
    %194 = vector.extract_strided_slice %190 {offsets = [0, 128], sizes = [1, 128], strides = [1, 1]} : vector<1x384xf32> to vector<1x128xf32>
    %195 = vector.extract_strided_slice %190 {offsets = [0, 256], sizes = [1, 128], strides = [1, 1]} : vector<1x384xf32> to vector<1x128xf32>
    %196 = arith.mulf %194, %177 : vector<1x128xf32>
    %197 = arith.mulf %193, %192 : vector<1x128xf32>
    %198 = arith.addf %196, %197 : vector<1x128xf32>
    %199 = math.tanh %198 : vector<1x128xf32>
    %200 = arith.mulf %195, %199 : vector<1x128xf32>
    %201 = tpu.concatenate %53, %74, %95, %116, %137, %158, %179, %200 in 0 : vector<1x128xf32>, vector<1x128xf32>, vector<1x128xf32>, vector<1x128xf32>, vector<1x128xf32>, vector<1x128xf32>, vector<1x128xf32>, vector<1x128xf32> -> vector<8x128xf32>
    %cst_46 = arith.constant 0.000000e+00 : f32
    %202 = vector.broadcast %cst_46 : f32 to vector<8x128xf32>
    %203 = arith.maximumf %201, %202 : vector<8x128xf32>
    %cst_47 = arith.constant dense<0.000000e+00> : vector<128xf32>
    %204 = vector.multi_reduction <add>, %203, %cst_47 [0] : vector<8x128xf32> to vector<128xf32>
    %205 = vector.shape_cast %204 : vector<128xf32> to vector<1x128xf32>
    %cst_48 = arith.constant 8.000000e+00 : f32
    %206 = vector.broadcast %cst_48 : f32 to vector<1x128xf32>
    %207 = arith.divf %205, %206 : vector<1x128xf32>
    %208 = vector.broadcast %207 : vector<1x128xf32> to vector<8x128xf32>
    %209 = arith.subf %203, %208 : vector<8x128xf32>
    %210 = arith.mulf %209, %209 : vector<8x128xf32>
    %cst_49 = arith.constant dense<0.000000e+00> : vector<128xf32>
    %211 = vector.multi_reduction <add>, %210, %cst_49 [0] : vector<8x128xf32> to vector<128xf32>
    %212 = vector.shape_cast %211 : vector<128xf32> to vector<1x128xf32>
    %cst_50 = arith.constant 8.000000e+00 : f32
    %213 = vector.broadcast %cst_50 : f32 to vector<1x128xf32>
    %214 = arith.divf %212, %213 : vector<1x128xf32>
    %c130 = arith.constant 130 : index
    %c0_51 = arith.constant 0 : index
    %215 = vector.load %arg2[%c130, %c0_51] : memref<133x128xf32, #tpu.memory_space<vmem>>, vector<1x128xf32>
    %c131 = arith.constant 131 : index
    %c0_52 = arith.constant 0 : index
    %216 = vector.load %arg2[%c131, %c0_52] : memref<133x128xf32, #tpu.memory_space<vmem>>, vector<1x128xf32>
    %217 = vector.broadcast %207 : vector<1x128xf32> to vector<8x128xf32>
    %218 = arith.subf %203, %217 : vector<8x128xf32>
    %cst_53 = arith.constant 9.99999974E-6 : f32
    %219 = vector.broadcast %cst_53 : f32 to vector<1x128xf32>
    %220 = arith.addf %214, %219 : vector<1x128xf32>
    %221 = math.rsqrt %220 : vector<1x128xf32>
    %222 = vector.broadcast %221 : vector<1x128xf32> to vector<8x128xf32>
    %223 = arith.mulf %218, %222 : vector<8x128xf32>
    %224 = vector.broadcast %215 : vector<1x128xf32> to vector<8x128xf32>
    %225 = arith.mulf %223, %224 : vector<8x128xf32>
    %226 = vector.broadcast %216 : vector<1x128xf32> to vector<8x128xf32>
    %227 = arith.addf %225, %226 : vector<8x128xf32>
    %c0_54 = arith.constant 0 : index
    %c0_55 = arith.constant 0 : index
    %228 = vector.load %arg2[%c0_54, %c0_55] : memref<133x128xf32, #tpu.memory_space<vmem>>, vector<128x128xf32>
    %cst_56 = arith.constant dense<0.000000e+00> : vector<8x128xf32>
    %229 = tpu.matmul %227, %228, %cst_56 {dimension_numbers = #tpu.dot_dimension_numbers<[1], [0], [0], [1], [0, 0, 1, 1], [], []>} : vector<8x128xf32>, vector<128x128xf32>, vector<8x128xf32> -> vector<8x128xf32>
    %c132 = arith.constant 132 : index
    %c0_57 = arith.constant 0 : index
    %230 = vector.load %arg2[%c132, %c0_57] : memref<133x128xf32, #tpu.memory_space<vmem>>, vector<1x128xf32>
    %231 = vector.broadcast %230 : vector<1x128xf32> to vector<8x128xf32>
    %232 = arith.addf %229, %231 : vector<8x128xf32>
    %cst_58 = arith.constant dense<0xFF800000> : vector<8xf32>
    %233 = vector.multi_reduction <maximumf>, %232, %cst_58 [1] : vector<8x128xf32> to vector<8xf32>
    %234 = vector.shape_cast %233 : vector<8xf32> to vector<8x1xf32>
    %235 = vector.broadcast %234 : vector<8x1xf32> to vector<8x128xf32>
    %236 = arith.subf %232, %235 : vector<8x128xf32>
    %237 = math.exp %236 : vector<8x128xf32>
    %cst_59 = arith.constant dense<0.000000e+00> : vector<8xf32>
    %238 = vector.multi_reduction <add>, %237, %cst_59 [1] : vector<8x128xf32> to vector<8xf32>
    %239 = vector.shape_cast %238 : vector<8xf32> to vector<8x1xf32>
    %240 = math.log %239 : vector<8x1xf32>
    %241 = arith.addf %240, %234 : vector<8x1xf32>
    %242 = vector.broadcast %241 : vector<8x1xf32> to vector<8x128xf32>
    %243 = arith.subf %232, %242 : vector<8x128xf32>
    %c0_60 = arith.constant 0 : index
    %c0_61 = arith.constant 0 : index
    %244 = vector.load %arg3[%c0_60, %c0_61] : memref<8x128xf32, #tpu.memory_space<vmem>>, vector<8x128xf32>
    tpu.vector_store %arg3[%c0_60, %c0_61], %243 {strides = array<i32>} : memref<8x128xf32, #tpu.memory_space<vmem>>, vector<8x128xf32>,
    return
  }
}

</mosaic_0001>

<llo_original>
// kernel: tpu_custom_call.1
$region0: #{tpu_custom_call.1}
  #allocation0 [shape = 'u32[]', space=smem, size = 0x4, offset = 0x4, fixed_abs, tag = 'smem constant byte address 0x4 - core index']
  #allocation1 [shape = 'u32[144,128]{1,0:T(1,128)}', space=vmem, size = 0x12000, scoped, tag = 'internal scratch']
  %s0 = inlined_call_operand.hbm [shape: f32[8,8], index: 0, kind: input, shape index: {}]
  %s1 = inlined_call_operand.hbm [shape: f32[137,512], index: 1, kind: input, shape index: {}]
  %s2 = inlined_call_operand.hbm [shape: f32[133,128], index: 2, kind: input, shape index: {}]
  %s3 = inlined_call_operand.hbm [shape: f32[8,128], index: 3, kind: output, shape index: {}]
  %s4 = sld [smem:[#allocation0]]
  $region34: #{tpu_custom_call.1} parent=0
    _
  %s6 = ssub.s32 1, %s4
  %s7 = scalar_select 0, %s6, %s4
  $region1: #{tpu_custom_call.1} parent=0
    #allocation2 [shape = 'u8[4096]{0}', space=vmem, size = 0x1000, scoped, tag = 'input window, operand 0, single buffered']
    #allocation3 [shape = 's32[1]{0}', space=sflag, size = 0x4, scoped, tag = 'scoped memory for tpu_custom_call.1']
    #allocation4 [shape = 's32[1]{0}', space=sflag, size = 0x4, scoped, tag = 'scoped memory for tpu_custom_call.1']
    #allocation5 [shape = 'u8[294912]{0}', space=vmem, size = 0x48000, scoped, tag = 'input window, operand 1, single buffered']
    #allocation6 [shape = 's32[1]{0}', space=sflag, size = 0x4, scoped, tag = 'scoped memory for tpu_custom_call.1']
    #allocation7 [shape = 'u8[69632]{0}', space=vmem, size = 0x11000, scoped, tag = 'input window, operand 2, single buffered']
    #allocation8 [shape = 'u8[4096]{0}', space=vmem, size = 0x1000, scoped, tag = 'output window, operand 0, single buffered']
    %8 = vsyncpa [#allocation3], 0
    %9 = vsyncpa [#allocation6], 0
    %10 = vsyncpa [#allocation4], 0
    // Predicated region
    $region2: #{tpu_custom_call.1} parent=1 // pred_check
      _
    $region3: #{tpu_custom_call.1} parent=1 // pred_check_branch
      %12 = sbr.rel (0) target = $region5
    $region4: #{tpu_custom_call.1} parent=1 // pred_region
      %s14 = ssub.s32 128, 128
      %15 = vsyncadd [#allocation3], %s14
      %s17 = sshll.u32 [#allocation2], 4
      %s18 = int_to_ptr.vmem [resolvable:$true] %s17
      %20 = dma.hbm_to_vmem [thread:$0]  %s0, 128, %s18, [#allocation3]
    $region5: #{tpu_custom_call.1} parent=1 // pred_fallthru
      _
    // Predicated region
    $region6: #{tpu_custom_call.1} parent=1 // pred_check
      _
    $region7: #{tpu_custom_call.1} parent=1 // pred_check_branch
      %22 = sbr.rel (0) target = $region9
    $region8: #{tpu_custom_call.1} parent=1 // pred_region
      %s24 = ssub.s32 9216, 9216
      %25 = vsyncadd [#allocation6], %s24
      %s26 = sshll.u32 [#allocation5], 4
      %s27 = int_to_ptr.vmem [resolvable:$true] %s26
      %32 = dma.hbm_to_vmem [thread:$0]  %s1, 9216, %s27, [#allocation6], 512, 512, 32
    $region9: #{tpu_custom_call.1} parent=1 // pred_fallthru
      _
    // Predicated region
    $region10: #{tpu_custom_call.1} parent=1 // pred_check
      _
    $region11: #{tpu_custom_call.1} parent=1 // pred_check_branch
      %34 = sbr.rel (0) target = $region13
    $region12: #{tpu_custom_call.1} parent=1 // pred_region
      %s36 = ssub.s32 2176, 2176
      %37 = vsyncadd [#allocation6], %s36
      %s38 = sshll.u32 [#allocation7], 4
      %s39 = int_to_ptr.vmem [resolvable:$true] %s38
      %44 = dma.hbm_to_vmem [thread:$0]  %s2, 2176, %s39, [#allocation6], 128, 128, 8
    $region13: #{tpu_custom_call.1} parent=1 // pred_fallthru
      _
    // Predicated region
    $region14: #{tpu_custom_call.1} parent=1 // pred_check
      _
    $region15: #{tpu_custom_call.1} parent=1 // pred_check_branch
      %46 = sbr.rel (0) target = $region17
    $region16: #{tpu_custom_call.1} parent=1 // pred_region
      %47 = dma.done [#allocation3], 128
    $region17: #{tpu_custom_call.1} parent=1 // pred_fallthru
      _
    // Predicated region
    $region18: #{tpu_custom_call.1} parent=1 // pred_check
      _
    $region19: #{tpu_custom_call.1} parent=1 // pred_check_branch
      %49 = sbr.rel (0) target = $region21
    $region20: #{tpu_custom_call.1} parent=1 // pred_region
      %50 = dma.done [#allocation6], 9216
    $region21: #{tpu_custom_call.1} parent=1 // pred_fallthru
      _
    // Predicated region
    $region22: #{tpu_custom_call.1} parent=1 // pred_check
      _
    $region23: #{tpu_custom_call.1} parent=1 // pred_check_branch
      %52 = sbr.rel (0) target = $region25
    $region24: #{tpu_custom_call.1} parent=1 // pred_region
      %53 = dma.done [#allocation6], 2176
    $region25: #{tpu_custom_call.1} parent=1 // pred_fallthru
      _
    %v54 = vld [vmem:[#allocation2] sm:$0xff]
    %v55 = vld [vmem:[#allocation7 + $0x80] sm:$0x1]
    %v56 = vld [vmem:[#allocation7 + $0x81] sm:$0x1]
    %vm57 = vcmask 64512
    %v58 = vsel %vm57, %v54, 0.0
    %v59 = vrot.slane %v58, 4
    %v60 = vadd.f32 %v58, %v59
    %v61 = vrot.slane %v60, 2
    %v62 = vadd.f32 %v60, %v61
    %v63 = vrot.slane %v62, 1
    %v64 = vadd.f32 %v62, %v63
    %v65 = vrcp.pop 8.0
    %v66 = vmul.f32 %v64, %v65
    %v67 = vsub.f32 %v54, %v66
    %v68 = vmul.f32 %v67, %v67
    %v69 = vsel %vm57, %v68, 0.0
    %v70 = vrot.slane %v69, 4
    %v71 = vadd.f32 %v69, %v70
    %v72 = vrot.slane %v71, 2
    %v73 = vadd.f32 %v71, %v72
    %v74 = vrot.slane %v73, 1
    %v75 = vadd.f32 %v73, %v74
    %v76 = vmul.f32 %v75, %v65
    %v77 = vadd.f32 %v76, 1e-05
    %v78 = vrsqrt.pop %v77
    %v79 = vmul.f32 %v67, %v78
    %v80 = vlaneseq
    %v81 = vshrl.u32 %v80, 7
    %v82 = vsub.s32 0, %v81
    %v83 = vrot.slane %v55, %v82
    %v84 = vmul.f32 %v79, %v83
    %v85 = vlaneseq
    %v86 = vshrl.u32 %v85, 7
    %v87 = vsub.s32 0, %v86
    %v88 = vrot.slane %v56, %v87
    %v89 = vadd.f32 %v84, %v88
    %v90 = vld [vmem:[#allocation5] sm:$0xff]
    %v91 = vld [vmem:[#allocation5 + $0x8] sm:$0xff]
    %v92 = vld [vmem:[#allocation5 + $0x10] sm:$0xff]
    %v93 = vld [vmem:[#allocation5 + $0x18] sm:$0xff]
    %s94 = scalar_lea.vmem [#allocation5], 544
    %v95 = vld [vmem:[%s94] ss:$8 sm:$0xf]
    %v97 = vlaneseq
    %v98 = vshrl.u32 %v97, 7
    %v99 = vsub.s32 0, %v98
    %v100 = vrot.slane %v95, %v99
    %v101 = vlaneseq
    %v102 = vshrl.u32 %v101, 7
    %v103 = vsub.s32 1, %v102
    %v104 = vrot.slane %v95, %v103
    %v105 = vlaneseq
    %v106 = vshrl.u32 %v105, 7
    %v107 = vsub.s32 2, %v106
    %v108 = vrot.slane %v95, %v107
    %v109 = vlaneseq
    %v110 = vshrl.u32 %v109, 7
    %v111 = vsub.s32 3, %v110
    %v112 = vrot.slane %v95, %v111
    %v118 = vsel %vm57, %v89, 0
    %120 = vmatprep.subr.mxu0 %v91
    %121 = vmatpush1.msra.mxu0 %v90
    %122 = vmatprep.subr.mxu0 0.0
    %123 = vmatpush1.msra.mxu0 0.0
    %124 = vmatprep.subr.mxu0 0.0
    %125 = vmatpush1.msra.mxu0 0.0
    %126 = vmatprep.subr.mxu0 0.0
    %127 = vmatpush1.msra.mxu0 0.0
    %128 = vmatprep.subr.mxu0 0.0
    %129 = vmatpush1.msra.mxu0 0.0
    %130 = vmatprep.subr.mxu0 0.0
    %131 = vmatpush1.msra.mxu0 0.0
    %132 = vmatprep.subr.mxu0 0.0
    %133 = vmatpush1.msra.mxu0 0.0
    %134 = vmatprep.subr.mxu0 0.0
    %135 = vmatpush1.msra.mxu0 0.0
    %136 = vmatprep.subr.mxu0 0.0
    %137 = vmatpush1.msra.mxu0 0.0
    %138 = vmatprep.subr.mxu0 0.0
    %139 = vmatpush1.msra.mxu0 0.0
    %140 = vmatprep.subr.mxu0 0.0
    %141 = vmatpush1.msra.mxu0 0.0
    %142 = vmatprep.subr.mxu0 0.0
    %143 = vmatpush1.msra.mxu0 0.0
    %144 = vmatprep.subr.mxu0 0.0
    %145 = vmatpush1.msra.mxu0 0.0
    %146 = vmatprep.subr.mxu0 0.0
    %147 = vmatpush1.msra.mxu0 0.0
    %148 = vmatprep.subr.mxu0 0.0
    %149 = vmatpush1.msra.mxu0 0.0
    %150 = vmatprep.subr.mxu0 0.0
    %151 = vmatpush1.msra.mxu0 0.0
    %152 = vmatprep.subr.mxu0 0.0
    %153 = vmatpush1.msra.mxu0 0.0
    %154 = vmatprep.subr.mxu0 0.0
    %155 = vmatpush1.msra.mxu0 0.0
    %156 = vmatprep.subr.mxu0 0.0
    %157 = vmatpush1.msra.mxu0 0.0
    %158 = vmatprep.subr.mxu0 0.0
    %159 = vmatpush1.msra.mxu0 0.0
    %160 = vmatprep.subr.mxu0 0.0
    %161 = vmatpush1.msra.mxu0 0.0
    %162 = vmatprep.subr.mxu0 0.0
    %163 = vmatpush1.msra.mxu0 0.0
    %164 = vmatprep.subr.mxu0 0.0
    %165 = vmatpush1.msra.mxu0 0.0
    %166 = vmatprep.subr.mxu0 0.0
    %167 = vmatpush1.msra.mxu0 0.0
    %168 = vmatprep.subr.mxu0 0.0
    %169 = vmatpush1.msra.mxu0 0.0
    %170 = vmatprep.subr.mxu0 0.0
    %171 = vmatpush1.msra.mxu0 0.0
    %172 = vmatprep.subr.mxu0 0.0
    %173 = vmatpush1.msra.mxu0 0.0
    %174 = vmatprep.subr.mxu0 0.0
    %175 = vmatpush1.msra.mxu0 0.0
    %176 = vmatprep.subr.mxu0 0.0
    %177 = vmatpush1.msra.mxu0 0.0
    %178 = vmatprep.subr.mxu0 0.0
    %179 = vmatpush1.msra.mxu0 0.0
    %180 = vmatprep.subr.mxu0 0.0
    %181 = vmatpush1.msra.mxu0 0.0
    %182 = vmatprep.subr.mxu0 0.0
    %183 = vmatpush1.msra.mxu0 0.0
    %184 = vmatprep.mubr.f32.mxu0 0.0
    %185 = vmatmul.mubr.f32.gmra.mrb[0].mxu0 %v118
    %v186 = vpop.f32.mrb[0].mxu0
    %v187 = vadd.f32 %v100, %v186
    %v188 = vpop.f32.mrb[0].mxu0
    %v189 = vadd.f32 %v104, %v188
    %190 = vdwg.mxu0
    %191 = vmatprep.subr.mxu0 %v93
    %192 = vmatpush1.msra.mxu0 %v92
    %193 = vmatprep.subr.mxu0 0.0
    %194 = vmatpush1.msra.mxu0 0.0
    %195 = vmatprep.subr.mxu0 0.0
    %196 = vmatpush1.msra.mxu0 0.0
    %197 = vmatprep.subr.mxu0 0.0
    %198 = vmatpush1.msra.mxu0 0.0
    %199 = vmatprep.subr.mxu0 0.0
    %200 = vmatpush1.msra.mxu0 0.0
    %201 = vmatprep.subr.mxu0 0.0
    %202 = vmatpush1.msra.mxu0 0.0
    %203 = vmatprep.subr.mxu0 0.0
    %204 = vmatpush1.msra.mxu0 0.0
    %205 = vmatprep.subr.mxu0 0.0
    %206 = vmatpush1.msra.mxu0 0.0
    %207 = vmatprep.subr.mxu0 0.0
    %208 = vmatpush1.msra.mxu0 0.0
    %209 = vmatprep.subr.mxu0 0.0
    %210 = vmatpush1.msra.mxu0 0.0
    %211 = vmatprep.subr.mxu0 0.0
    %212 = vmatpush1.msra.mxu0 0.0
    %213 = vmatprep.subr.mxu0 0.0
    %214 = vmatpush1.msra.mxu0 0.0
    %215 = vmatprep.subr.mxu0 0.0
    %216 = vmatpush1.msra.mxu0 0.0
    %217 = vmatprep.subr.mxu0 0.0
    %218 = vmatpush1.msra.mxu0 0.0
    %219 = vmatprep.subr.mxu0 0.0
    %220 = vmatpush1.msra.mxu0 0.0
    %221 = vmatprep.subr.mxu0 0.0
    %222 = vmatpush1.msra.mxu0 0.0
    %223 = vmatprep.subr.mxu0 0.0
    %224 = vmatpush1.msra.mxu0 0.0
    %225 = vmatprep.subr.mxu0 0.0
    %226 = vmatpush1.msra.mxu0 0.0
    %227 = vmatprep.subr.mxu0 0.0
    %228 = vmatpush1.msra.mxu0 0.0
    %229 = vmatprep.subr.mxu0 0.0
    %230 = vmatpush1.msra.mxu0 0.0
    %231 = vmatprep.subr.mxu0 0.0
    %232 = vmatpush1.msra.mxu0 0.0
    %233 = vmatprep.subr.mxu0 0.0
    %234 = vmatpush1.msra.mxu0 0.0
    %235 = vmatprep.subr.mxu0 0.0
    %236 = vmatpush1.msra.mxu0 0.0
    %237 = vmatprep.subr.mxu0 0.0
    %238 = vmatpush1.msra.mxu0 0.0
    %239 = vmatprep.subr.mxu0 0.0
    %240 = vmatpush1.msra.mxu0 0.0
    %241 = vmatprep.subr.mxu0 0.0
    %242 = vmatpush1.msra.mxu0 0.0
    %243 = vmatprep.subr.mxu0 0.0
    %244 = vmatpush1.msra.mxu0 0.0
    %245 = vmatprep.subr.mxu0 0.0
    %246 = vmatpush1.msra.mxu0 0.0
    %247 = vmatprep.subr.mxu0 0.0
    %248 = vmatpush1.msra.mxu0 0.0
    %249 = vmatprep.subr.mxu0 0.0
    %250 = vmatpush1.msra.mxu0 0.0
    %251 = vmatprep.subr.mxu0 0.0
    %252 = vmatpush1.msra.mxu0 0.0
    %253 = vmatprep.subr.mxu0 0.0
    %254 = vmatpush1.msra.mxu0 0.0
    %255 = vmatprep.mubr.f32.mxu0 0.0
    %256 = vmatmul.mubr.f32.gmra.mrb[0].mxu0 %v118
    %v257 = vpop.f32.mrb[0].mxu0
    %v258 = vadd.f32 %v108, %v257
    %v259 = vpop.f32.mrb[0].mxu0
    %v260 = vadd.f32 %v112, %v259
    %261 = vdwg.mxu0
    %v262 = vld [vmem:[#allocation5 + $0x20] sm:$0xff]
    %v263 = vld [vmem:[#allocation5 + $0x28] sm:$0xff]
    %v264 = vld [vmem:[#allocation5 + $0x30] sm:$0xff]
    %v265 = vld [vmem:[#allocation5 + $0x38] sm:$0xff]
    %v266 = vld [vmem:[#allocation5 + $0x40] sm:$0xff]
    %v267 = vld [vmem:[#allocation5 + $0x48] sm:$0xff]
    %v268 = vld [vmem:[#allocation5 + $0x50] sm:$0xff]
    %v269 = vld [vmem:[#allocation5 + $0x58] sm:$0xff]
    %v270 = vld [vmem:[#allocation5 + $0x60] sm:$0xff]
    %v271 = vld [vmem:[#allocation5 + $0x68] sm:$0xff]
    %v272 = vld [vmem:[#allocation5 + $0x70] sm:$0xff]
    %v273 = vld [vmem:[#allocation5 + $0x78] sm:$0xff]
    %v274 = vld [vmem:[#allocation5 + $0x80] sm:$0xff]
    %v275 = vld [vmem:[#allocation5 + $0x88] sm:$0xff]
    %v276 = vld [vmem:[#allocation5 + $0x90] sm:$0xff]
    %v277 = vld [vmem:[#allocation5 + $0x98] sm:$0xff]
    %v278 = vld [vmem:[#allocation5 + $0xa0] sm:$0xff]
    %v279 = vld [vmem:[#allocation5 + $0xa8] sm:$0xff]
    %v280 = vld [vmem:[#allocation5 + $0xb0] sm:$0xff]
    %v281 = vld [vmem:[#allocation5 + $0xb8] sm:$0xff]
    %v282 = vld [vmem:[#allocation5 + $0xc0] sm:$0xff]
    %v283 = vld [vmem:[#allocation5 + $0xc8] sm:$0xff]
    %v284 = vld [vmem:[#allocation5 + $0xd0] sm:$0xff]
    %v285 = vld [vmem:[#allocation5 + $0xd8] sm:$0xff]
    %v286 = vld [vmem:[#allocation5 + $0xe0] sm:$0xff]
    %v287 = vld [vmem:[#allocation5 + $0xe8] sm:$0xff]
    %v288 = vld [vmem:[#allocation5 + $0xf0] sm:$0xff]
    %v289 = vld [vmem:[#allocation5 + $0xf8] sm:$0xff]
    %v290 = vld [vmem:[#allocation5 + $0x100] sm:$0xff]
    %v291 = vld [vmem:[#allocation5 + $0x108] sm:$0xff]
    %v292 = vld [vmem:[#allocation5 + $0x110] sm:$0xff]
    %v293 = vld [vmem:[#allocation5 + $0x118] sm:$0xff]
    %v294 = vld [vmem:[#allocation5 + $0x120] sm:$0xff]
    %v295 = vld [vmem:[#allocation5 + $0x128] sm:$0xff]
    %v296 = vld [vmem:[#allocation5 + $0x130] sm:$0xff]
    %v297 = vld [vmem:[#allocation5 + $0x138] sm:$0xff]
    %v298 = vld [vmem:[#allocation5 + $0x140] sm:$0xff]
    %v299 = vld [vmem:[#allocation5 + $0x148] sm:$0xff]
    %v300 = vld [vmem:[#allocation5 + $0x150] sm:$0xff]
    %v301 = vld [vmem:[#allocation5 + $0x158] sm:$0xff]
    %v302 = vld [vmem:[#allocation5 + $0x160] sm:$0xff]
    %v303 = vld [vmem:[#allocation5 + $0x168] sm:$0xff]
    %v304 = vld [vmem:[#allocation5 + $0x170] sm:$0xff]
    %v305 = vld [vmem:[#allocation5 + $0x178] sm:$0xff]
    %v306 = vld [vmem:[#allocation5 + $0x180] sm:$0xff]
    %v307 = vld [vmem:[#allocation5 + $0x188] sm:$0xff]
    %v308 = vld [vmem:[#allocation5 + $0x190] sm:$0xff]
    %v309 = vld [vmem:[#allocation5 + $0x198] sm:$0xff]
    %v310 = vld [vmem:[#allocation5 + $0x1a0] sm:$0xff]
    %v311 = vld [vmem:[#allocation5 + $0x1a8] sm:$0xff]
    %v312 = vld [vmem:[#allocation5 + $0x1b0] sm:$0xff]
    %v313 = vld [vmem:[#allocation5 + $0x1b8] sm:$0xff]
    %v314 = vld [vmem:[#allocation5 + $0x1c0] sm:$0xff]
    %v315 = vld [vmem:[#allocation5 + $0x1c8] sm:$0xff]
    %v316 = vld [vmem:[#allocation5 + $0x1d0] sm:$0xff]
    %v317 = vld [vmem:[#allocation5 + $0x1d8] sm:$0xff]
    %v318 = vld [vmem:[#allocation5 + $0x1e0] sm:$0xff]
    %v319 = vld [vmem:[#allocation5 + $0x1e8] sm:$0xff]
    %v320 = vld [vmem:[#allocation5 + $0x1f0] sm:$0xff]
    %v321 = vld [vmem:[#allocation5 + $0x1f8] sm:$0xff]
    %v322 = vld [vmem:[#allocation5 + $0x200] sm:$0xff]
    %v323 = vld [vmem:[#allocation5 + $0x208] sm:$0xff]
    %v324 = vld [vmem:[#allocation5 + $0x210] sm:$0xff]
    %v325 = vld [vmem:[#allocation5 + $0x218] sm:$0xff]
    %326 = vmatprep.subr.mxu0 %v263
    %327 = vmatpush1.msra.mxu0 %v262
    %328 = vmatprep.subr.mxu0 %v267
    %329 = vmatpush1.msra.mxu0 %v266
    %330 = vmatprep.subr.mxu0 %v271
    %331 = vmatpush1.msra.mxu0 %v270
    %332 = vmatprep.subr.mxu0 %v275
    %333 = vmatpush1.msra.mxu0 %v274
    %334 = vmatprep.subr.mxu0 %v279
    %335 = vmatpush1.msra.mxu0 %v278
    %336 = vmatprep.subr.mxu0 %v283
    %337 = vmatpush1.msra.mxu0 %v282
    %338 = vmatprep.subr.mxu0 %v287
    %339 = vmatpush1.msra.mxu0 %v286
    %340 = vmatprep.subr.mxu0 %v291
    %341 = vmatpush1.msra.mxu0 %v290
    %342 = vmatprep.subr.mxu0 %v295
    %343 = vmatpush1.msra.mxu0 %v294
    %344 = vmatprep.subr.mxu0 %v299
    %345 = vmatpush1.msra.mxu0 %v298
    %346 = vmatprep.subr.mxu0 %v303
    %347 = vmatpush1.msra.mxu0 %v302
    %348 = vmatprep.subr.mxu0 %v307
    %349 = vmatpush1.msra.mxu0 %v306
    %350 = vmatprep.subr.mxu0 %v311
    %351 = vmatpush1.msra.mxu0 %v310
    %352 = vmatprep.subr.mxu0 %v315
    %353 = vmatpush1.msra.mxu0 %v314
    %354 = vmatprep.subr.mxu0 %v319
    %355 = vmatpush1.msra.mxu0 %v318
    %356 = vmatprep.subr.mxu0 %v323
    %357 = vmatpush1.msra.mxu0 %v322
    %358 = vmatprep.subr.mxu0 0.0
    %359 = vmatpush1.msra.mxu0 0.0
    %360 = vmatprep.subr.mxu0 0.0
    %361 = vmatpush1.msra.mxu0 0.0
    %362 = vmatprep.subr.mxu0 0.0
    %363 = vmatpush1.msra.mxu0 0.0
    %364 = vmatprep.subr.mxu0 0.0
    %365 = vmatpush1.msra.mxu0 0.0
    %366 = vmatprep.subr.mxu0 0.0
    %367 = vmatpush1.msra.mxu0 0.0
    %368 = vmatprep.subr.mxu0 0.0
    %369 = vmatpush1.msra.mxu0 0.0
    %370 = vmatprep.subr.mxu0 0.0
    %371 = vmatpush1.msra.mxu0 0.0
    %372 = vmatprep.subr.mxu0 0.0
    %373 = vmatpush1.msra.mxu0 0.0
    %374 = vmatprep.subr.mxu0 0.0
    %375 = vmatpush1.msra.mxu0 0.0
    %376 = vmatprep.subr.mxu0 0.0
    %377 = vmatpush1.msra.mxu0 0.0
    %378 = vmatprep.subr.mxu0 0.0
    %379 = vmatpush1.msra.mxu0 0.0
    %380 = vmatprep.subr.mxu0 0.0
    %381 = vmatpush1.msra.mxu0 0.0
    %382 = vmatprep.subr.mxu0 0.0
    %383 = vmatpush1.msra.mxu0 0.0
    %384 = vmatprep.subr.mxu0 0.0
    %385 = vmatpush1.msra.mxu0 0.0
    %386 = vmatprep.subr.mxu0 0.0
    %387 = vmatpush1.msra.mxu0 0.0
    %388 = vmatprep.subr.mxu0 0.0
    %389 = vmatpush1.msra.mxu0 0.0
    %390 = vmatprep.mubr.f32.mxu0 0.0
    %391 = vmatmul.mubr.f32.gmra.mrb[0].mxu0 0.0
    %v392 = vpop.f32.mrb[0].mxu0
    %v393 = vadd.f32 0.0, %v392
    %v394 = vpop.f32.mrb[0].mxu0
    %v395 = vadd.f32 0.0, %v394
    %396 = vdwg.mxu0
    %397 = vmatprep.subr.mxu0 %v265
    %398 = vmatpush1.msra.mxu0 %v264
    %399 = vmatprep.subr.mxu0 %v269
    %400 = vmatpush1.msra.mxu0 %v268
    %401 = vmatprep.subr.mxu0 %v273
    %402 = vmatpush1.msra.mxu0 %v272
    %403 = vmatprep.subr.mxu0 %v277
    %404 = vmatpush1.msra.mxu0 %v276
    %405 = vmatprep.subr.mxu0 %v281
    %406 = vmatpush1.msra.mxu0 %v280
    %407 = vmatprep.subr.mxu0 %v285
    %408 = vmatpush1.msra.mxu0 %v284
    %409 = vmatprep.subr.mxu0 %v289
    %410 = vmatpush1.msra.mxu0 %v288
    %411 = vmatprep.subr.mxu0 %v293
    %412 = vmatpush1.msra.mxu0 %v292
    %413 = vmatprep.subr.mxu0 %v297
    %414 = vmatpush1.msra.mxu0 %v296
    %415 = vmatprep.subr.mxu0 %v301
    %416 = vmatpush1.msra.mxu0 %v300
    %417 = vmatprep.subr.mxu0 %v305
    %418 = vmatpush1.msra.mxu0 %v304
    %419 = vmatprep.subr.mxu0 %v309
    %420 = vmatpush1.msra.mxu0 %v308
    %421 = vmatprep.subr.mxu0 %v313
    %422 = vmatpush1.msra.mxu0 %v312
    %423 = vmatprep.subr.mxu0 %v317
    %424 = vmatpush1.msra.mxu0 %v316
    %425 = vmatprep.subr.mxu0 %v321
    %426 = vmatpush1.msra.mxu0 %v320
    %427 = vmatprep.subr.mxu0 %v325
    %428 = vmatpush1.msra.mxu0 %v324
    %429 = vmatprep.subr.mxu0 0.0
    %430 = vmatpush1.msra.mxu0 0.0
    %431 = vmatprep.subr.mxu0 0.0
    %432 = vmatpush1.msra.mxu0 0.0
    %433 = vmatprep.subr.mxu0 0.0
    %434 = vmatpush1.msra.mxu0 0.0
    %435 = vmatprep.subr.mxu0 0.0
    %436 = vmatpush1.msra.mxu0 0.0
    %437 = vmatprep.subr.mxu0 0.0
    %438 = vmatpush1.msra.mxu0 0.0
    %439 = vmatprep.subr.mxu0 0.0
    %440 = vmatpush1.msra.mxu0 0.0
    %441 = vmatprep.subr.mxu0 0.0
    %442 = vmatpush1.msra.mxu0 0.0
    %443 = vmatprep.subr.mxu0 0.0
    %444 = vmatpush1.msra.mxu0 0.0
    %445 = vmatprep.subr.mxu0 0.0
    %446 = vmatpush1.msra.mxu0 0.0
    %447 = vmatprep.subr.mxu0 0.0
    %448 = vmatpush1.msra.mxu0 0.0
    %449 = vmatprep.subr.mxu0 0.0
    %450 = vmatpush1.msra.mxu0 0.0
    %451 = vmatprep.subr.mxu0 0.0
    %452 = vmatpush1.msra.mxu0 0.0
    %453 = vmatprep.subr.mxu0 0.0
    %454 = vmatpush1.msra.mxu0 0.0
    %455 = vmatprep.subr.mxu0 0.0
    %456 = vmatpush1.msra.mxu0 0.0
    %457 = vmatprep.subr.mxu0 0.0
    %458 = vmatpush1.msra.mxu0 0.0
    %459 = vmatprep.subr.mxu0 0.0
    %460 = vmatpush1.msra.mxu0 0.0
    %461 = vmatprep.mubr.f32.mxu0 0.0
    %462 = vmatmul.mubr.f32.gmra.mrb[0].mxu0 0.0
    %v463 = vpop.f32.mrb[0].mxu0
    %v464 = vadd.f32 0.0, %v463
    %v465 = vpop.f32.mrb[0].mxu0
    %v466 = vadd.f32 0.0, %v465
    %467 = vdwg.mxu0
    %v468 = vadd.f32 %v187, %v393
    %v469 = vadd.f32 %v189, %v395
    %v470 = vadd.f32 %v258, %v464
    %v471 = vadd.f32 %v260, %v466
    %v472 = vmul.f32 %v468, 0.5
    %v473 = vmul.f32 %v469, 0.5
    %v474 = vmul.f32 %v470, 0.5
    %v475 = vtanh.pop %v472
    %v476 = vtanh.pop %v473
    %v477 = vtanh.pop %v474
    %v478 = vmul.f32 %v475, 0.5
    %v479 = vmul.f32 %v476, 0.5
    %v480 = vmul.f32 %v477, 0.5
    %v481 = vadd.f32 %v478, 0.5
    %v482 = vadd.f32 %v479, 0.5
    %v483 = vadd.f32 %v480, 0.5
    %v484 = vtanh.pop %v471
    %v485 = vmul.f32 %v482, 0.0
    %v486 = vmul.f32 %v481, %v484
    %v487 = vadd.f32 %v485, %v486
    %v488 = vtanh.pop %v487
    %v489 = vmul.f32 %v483, %v488
    %490 = vmatprep.subr.mxu0 %v263
    %491 = vmatpush1.msra.mxu0 %v262
    %492 = vmatprep.subr.mxu0 %v267
    %493 = vmatpush1.msra.mxu0 %v266
    %494 = vmatprep.subr.mxu0 %v271
    %495 = vmatpush1.msra.mxu0 %v270
    %496 = vmatprep.subr.mxu0 %v275
    %497 = vmatpush1.msra.mxu0 %v274
    %498 = vmatprep.subr.mxu0 %v279
    %499 = vmatpush1.msra.mxu0 %v278
    %500 = vmatprep.subr.mxu0 %v283
    %501 = vmatpush1.msra.mxu0 %v282
    %502 = vmatprep.subr.mxu0 %v287
    %503 = vmatpush1.msra.mxu0 %v286
    %504 = vmatprep.subr.mxu0 %v291
    %505 = vmatpush1.msra.mxu0 %v290
    %506 = vmatprep.subr.mxu0 %v295
    %507 = vmatpush1.msra.mxu0 %v294
    %508 = vmatprep.subr.mxu0 %v299
    %509 = vmatpush1.msra.mxu0 %v298
    %510 = vmatprep.subr.mxu0 %v303
    %511 = vmatpush1.msra.mxu0 %v302
    %512 = vmatprep.subr.mxu0 %v307
    %513 = vmatpush1.msra.mxu0 %v306
    %514 = vmatprep.subr.mxu0 %v311
    %515 = vmatpush1.msra.mxu0 %v310
    %516 = vmatprep.subr.mxu0 %v315
    %517 = vmatpush1.msra.mxu0 %v314
    %518 = vmatprep.subr.mxu0 %v319
    %519 = vmatpush1.msra.mxu0 %v318
    %520 = vmatprep.subr.mxu0 %v323
    %521 = vmatpush1.msra.mxu0 %v322
    %522 = vmatprep.subr.mxu0 0.0
    %523 = vmatpush1.msra.mxu0 0.0
    %524 = vmatprep.subr.mxu0 0.0
    %525 = vmatpush1.msra.mxu0 0.0
    %526 = vmatprep.subr.mxu0 0.0
    %527 = vmatpush1.msra.mxu0 0.0
    %528 = vmatprep.subr.mxu0 0.0
    %529 = vmatpush1.msra.mxu0 0.0
    %530 = vmatprep.subr.mxu0 0.0
    %531 = vmatpush1.msra.mxu0 0.0
    %532 = vmatprep.subr.mxu0 0.0
    %533 = vmatpush1.msra.mxu0 0.0
    %534 = vmatprep.subr.mxu0 0.0
    %535 = vmatpush1.msra.mxu0 0.0
    %536 = vmatprep.subr.mxu0 0.0
    %537 = vmatpush1.msra.mxu0 0.0
    %538 = vmatprep.subr.mxu0 0.0
    %539 = vmatpush1.msra.mxu0 0.0
    %540 = vmatprep.subr.mxu0 0.0
    %541 = vmatpush1.msra.mxu0 0.0
    %542 = vmatprep.subr.mxu0 0.0
    %543 = vmatpush1.msra.mxu0 0.0
    %544 = vmatprep.subr.mxu0 0.0
    %545 = vmatpush1.msra.mxu0 0.0
    %546 = vmatprep.subr.mxu0 0.0
    %547 = vmatpush1.msra.mxu0 0.0
    %548 = vmatprep.subr.mxu0 0.0
    %549 = vmatpush1.msra.mxu0 0.0
    %550 = vmatprep.subr.mxu0 0.0
    %551 = vmatpush1.msra.mxu0 0.0
    %552 = vmatprep.subr.mxu0 0.0
    %553 = vmatpush1.msra.mxu0 0.0
    %554 = vmatprep.mubr.f32.mxu0 0.0
    %555 = vmatmul.mubr.f32.gmra.mrb[0].mxu0 %v489
    %v556 = vpop.f32.mrb[0].mxu0
    %v557 = vadd.f32 0.0, %v556
    %v558 = vpop.f32.mrb[0].mxu0
    %v559 = vadd.f32 0.0, %v558
    %560 = vdwg.mxu0
    %561 = vmatprep.subr.mxu0 %v265
    %562 = vmatpush1.msra.mxu0 %v264
    %563 = vmatprep.subr.mxu0 %v269
    %564 = vmatpush1.msra.mxu0 %v268
    %565 = vmatprep.subr.mxu0 %v273
    %566 = vmatpush1.msra.mxu0 %v272
    %567 = vmatprep.subr.mxu0 %v277
    %568 = vmatpush1.msra.mxu0 %v276
    %569 = vmatprep.subr.mxu0 %v281
    %570 = vmatpush1.msra.mxu0 %v280
    %571 = vmatprep.subr.mxu0 %v285
    %572 = vmatpush1.msra.mxu0 %v284
    %573 = vmatprep.subr.mxu0 %v289
    %574 = vmatpush1.msra.mxu0 %v288
    %575 = vmatprep.subr.mxu0 %v293
    %576 = vmatpush1.msra.mxu0 %v292
    %577 = vmatprep.subr.mxu0 %v297
    %578 = vmatpush1.msra.mxu0 %v296
    %579 = vmatprep.subr.mxu0 %v301
    %580 = vmatpush1.msra.mxu0 %v300
    %581 = vmatprep.subr.mxu0 %v305
    %582 = vmatpush1.msra.mxu0 %v304
    %583 = vmatprep.subr.mxu0 %v309
    %584 = vmatpush1.msra.mxu0 %v308
    %585 = vmatprep.subr.mxu0 %v313
    %586 = vmatpush1.msra.mxu0 %v312
    %587 = vmatprep.subr.mxu0 %v317
    %588 = vmatpush1.msra.mxu0 %v316
    %589 = vmatprep.subr.mxu0 %v321
    %590 = vmatpush1.msra.mxu0 %v320
    %591 = vmatprep.subr.mxu0 %v325
    %592 = vmatpush1.msra.mxu0 %v324
    %593 = vmatprep.subr.mxu0 0.0
    %594 = vmatpush1.msra.mxu0 0.0
    %595 = vmatprep.subr.mxu0 0.0
    %596 = vmatpush1.msra.mxu0 0.0
    %597 = vmatprep.subr.mxu0 0.0
    %598 = vmatpush1.msra.mxu0 0.0
    %599 = vmatprep.subr.mxu0 0.0
    %600 = vmatpush1.msra.mxu0 0.0
    %601 = vmatprep.subr.mxu0 0.0
    %602 = vmatpush1.msra.mxu0 0.0
    %603 = vmatprep.subr.mxu0 0.0
    %604 = vmatpush1.msra.mxu0 0.0
    %605 = vmatprep.subr.mxu0 0.0
    %606 = vmatpush1.msra.mxu0 0.0
    %607 = vmatprep.subr.mxu0 0.0
    %608 = vmatpush1.msra.mxu0 0.0
    %609 = vmatprep.subr.mxu0 0.0
    %610 = vmatpush1.msra.mxu0 0.0
    %611 = vmatprep.subr.mxu0 0.0
    %612 = vmatpush1.msra.mxu0 0.0
    %613 = vmatprep.subr.mxu0 0.0
    %614 = vmatpush1.msra.mxu0 0.0
    %615 = vmatprep.subr.mxu0 0.0
    %616 = vmatpush1.msra.mxu0 0.0
    %617 = vmatprep.subr.mxu0 0.0
    %618 = vmatpush1.msra.mxu0 0.0
    %619 = vmatprep.subr.mxu0 0.0
    %620 = vmatpush1.msra.mxu0 0.0
    %621 = vmatprep.subr.mxu0 0.0
    %622 = vmatpush1.msra.mxu0 0.0
    %623 = vmatprep.subr.mxu0 0.0
    %624 = vmatpush1.msra.mxu0 0.0
    %625 = vmatprep.mubr.f32.mxu0 0.0
    %626 = vmatmul.mubr.f32.gmra.mrb[0].mxu0 %v489
    %v627 = vpop.f32.mrb[0].mxu0
    %v628 = vadd.f32 0.0, %v627
    %v629 = vpop.f32.mrb[0].mxu0
    %v630 = vadd.f32 0.0, %v629
    %631 = vdwg.mxu0
    %v636 = vrot.slane %v557, 7
    %v637 = vrot.slane %v559, 7
    %v638 = vrot.slane %v628, 7
    %v639 = vrot.slane %v630, 7
    %v644 = vadd.f32 %v187, %v636
    %v645 = vadd.f32 %v189, %v637
    %v646 = vadd.f32 %v258, %v638
    %v647 = vadd.f32 %v260, %v639
    %v648 = vmul.f32 %v644, 0.5
    %v649 = vmul.f32 %v645, 0.5
    %v650 = vmul.f32 %v646, 0.5
    %v651 = vtanh.pop %v648
    %v652 = vtanh.pop %v649
    %v653 = vtanh.pop %v650
    %v654 = vmul.f32 %v651, 0.5
    %v655 = vmul.f32 %v652, 0.5
    %v656 = vmul.f32 %v653, 0.5
    %v657 = vadd.f32 %v654, 0.5
    %v658 = vadd.f32 %v655, 0.5
    %v659 = vadd.f32 %v656, 0.5
    %v660 = vtanh.pop %v647
    %v662 = vrot.slane %v487, 7
    %v664 = vmul.f32 %v658, %v662
    %v665 = vmul.f32 %v657, %v660
    %v666 = vadd.f32 %v664, %v665
    %v667 = vtanh.pop %v666
    %v668 = vmul.f32 %v659, %v667
    %v670 = vrot.slane %v668, 1
    %672 = vmatprep.subr.mxu0 %v263
    %673 = vmatpush1.msra.mxu0 %v262
    %674 = vmatprep.subr.mxu0 %v267
    %675 = vmatpush1.msra.mxu0 %v266
    %676 = vmatprep.subr.mxu0 %v271
    %677 = vmatpush1.msra.mxu0 %v270
    %678 = vmatprep.subr.mxu0 %v275
    %679 = vmatpush1.msra.mxu0 %v274
    %680 = vmatprep.subr.mxu0 %v279
    %681 = vmatpush1.msra.mxu0 %v278
    %682 = vmatprep.subr.mxu0 %v283
    %683 = vmatpush1.msra.mxu0 %v282
    %684 = vmatprep.subr.mxu0 %v287
    %685 = vmatpush1.msra.mxu0 %v286
    %686 = vmatprep.subr.mxu0 %v291
    %687 = vmatpush1.msra.mxu0 %v290
    %688 = vmatprep.subr.mxu0 %v295
    %689 = vmatpush1.msra.mxu0 %v294
    %690 = vmatprep.subr.mxu0 %v299
    %691 = vmatpush1.msra.mxu0 %v298
    %692 = vmatprep.subr.mxu0 %v303
    %693 = vmatpush1.msra.mxu0 %v302
    %694 = vmatprep.subr.mxu0 %v307
    %695 = vmatpush1.msra.mxu0 %v306
    %696 = vmatprep.subr.mxu0 %v311
    %697 = vmatpush1.msra.mxu0 %v310
    %698 = vmatprep.subr.mxu0 %v315
    %699 = vmatpush1.msra.mxu0 %v314
    %700 = vmatprep.subr.mxu0 %v319
    %701 = vmatpush1.msra.mxu0 %v318
    %702 = vmatprep.subr.mxu0 %v323
    %703 = vmatpush1.msra.mxu0 %v322
    %704 = vmatprep.subr.mxu0 0.0
    %705 = vmatpush1.msra.mxu0 0.0
    %706 = vmatprep.subr.mxu0 0.0
    %707 = vmatpush1.msra.mxu0 0.0
    %708 = vmatprep.subr.mxu0 0.0
    %709 = vmatpush1.msra.mxu0 0.0
    %710 = vmatprep.subr.mxu0 0.0
    %711 = vmatpush1.msra.mxu0 0.0
    %712 = vmatprep.subr.mxu0 0.0
    %713 = vmatpush1.msra.mxu0 0.0
    %714 = vmatprep.subr.mxu0 0.0
    %715 = vmatpush1.msra.mxu0 0.0
    %716 = vmatprep.subr.mxu0 0.0
    %717 = vmatpush1.msra.mxu0 0.0
    %718 = vmatprep.subr.mxu0 0.0
    %719 = vmatpush1.msra.mxu0 0.0
    %720 = vmatprep.subr.mxu0 0.0
    %721 = vmatpush1.msra.mxu0 0.0
    %722 = vmatprep.subr.mxu0 0.0
    %723 = vmatpush1.msra.mxu0 0.0
    %724 = vmatprep.subr.mxu0 0.0
    %725 = vmatpush1.msra.mxu0 0.0
    %726 = vmatprep.subr.mxu0 0.0
    %727 = vmatpush1.msra.mxu0 0.0
    %728 = vmatprep.subr.mxu0 0.0
    %729 = vmatpush1.msra.mxu0 0.0
    %730 = vmatprep.subr.mxu0 0.0
    %731 = vmatpush1.msra.mxu0 0.0
    %732 = vmatprep.subr.mxu0 0.0
    %733 = vmatpush1.msra.mxu0 0.0
    %734 = vmatprep.subr.mxu0 0.0
    %735 = vmatpush1.msra.mxu0 0.0
    %736 = vmatprep.mubr.f32.mxu0 0.0
    %737 = vmatmul.mubr.f32.gmra.mrb[0].mxu0 %v670
    %v738 = vpop.f32.mrb[0].mxu0
    %v739 = vadd.f32 0.0, %v738
    %v740 = vpop.f32.mrb[0].mxu0
    %v741 = vadd.f32 0.0, %v740
    %742 = vdwg.mxu0
    %743 = vmatprep.subr.mxu0 %v265
    %744 = vmatpush1.msra.mxu0 %v264
    %745 = vmatprep.subr.mxu0 %v269
    %746 = vmatpush1.msra.mxu0 %v268
    %747 = vmatprep.subr.mxu0 %v273
    %748 = vmatpush1.msra.mxu0 %v272
    %749 = vmatprep.subr.mxu0 %v277
    %750 = vmatpush1.msra.mxu0 %v276
    %751 = vmatprep.subr.mxu0 %v281
    %752 = vmatpush1.msra.mxu0 %v280
    %753 = vmatprep.subr.mxu0 %v285
    %754 = vmatpush1.msra.mxu0 %v284
    %755 = vmatprep.subr.mxu0 %v289
    %756 = vmatpush1.msra.mxu0 %v288
    %757 = vmatprep.subr.mxu0 %v293
    %758 = vmatpush1.msra.mxu0 %v292
    %759 = vmatprep.subr.mxu0 %v297
    %760 = vmatpush1.msra.mxu0 %v296
    %761 = vmatprep.subr.mxu0 %v301
    %762 = vmatpush1.msra.mxu0 %v300
    %763 = vmatprep.subr.mxu0 %v305
    %764 = vmatpush1.msra.mxu0 %v304
    %765 = vmatprep.subr.mxu0 %v309
    %766 = vmatpush1.msra.mxu0 %v308
    %767 = vmatprep.subr.mxu0 %v313
    %768 = vmatpush1.msra.mxu0 %v312
    %769 = vmatprep.subr.mxu0 %v317
    %770 = vmatpush1.msra.mxu0 %v316
    %771 = vmatprep.subr.mxu0 %v321
    %772 = vmatpush1.msra.mxu0 %v320
    %773 = vmatprep.subr.mxu0 %v325
    %774 = vmatpush1.msra.mxu0 %v324
    %775 = vmatprep.subr.mxu0 0.0
    %776 = vmatpush1.msra.mxu0 0.0
    %777 = vmatprep.subr.mxu0 0.0
    %778 = vmatpush1.msra.mxu0 0.0
    %779 = vmatprep.subr.mxu0 0.0
    %780 = vmatpush1.msra.mxu0 0.0
    %781 = vmatprep.subr.mxu0 0.0
    %782 = vmatpush1.msra.mxu0 0.0
    %783 = vmatprep.subr.mxu0 0.0
    %784 = vmatpush1.msra.mxu0 0.0
    %785 = vmatprep.subr.mxu0 0.0
    %786 = vmatpush1.msra.mxu0 0.0
    %787 = vmatprep.subr.mxu0 0.0
    %788 = vmatpush1.msra.mxu0 0.0
    %789 = vmatprep.subr.mxu0 0.0
    %790 = vmatpush1.msra.mxu0 0.0
    %791 = vmatprep.subr.mxu0 0.0
    %792 = vmatpush1.msra.mxu0 0.0
    %793 = vmatprep.subr.mxu0 0.0
    %794 = vmatpush1.msra.mxu0 0.0
    %795 = vmatprep.subr.mxu0 0.0
    %796 = vmatpush1.msra.mxu0 0.0
    %797 = vmatprep.subr.mxu0 0.0
    %798 = vmatpush1.msra.mxu0 0.0
    %799 = vmatprep.subr.mxu0 0.0
    %800 = vmatpush1.msra.mxu0 0.0
    %801 = vmatprep.subr.mxu0 0.0
    %802 = vmatpush1.msra.mxu0 0.0
    %803 = vmatprep.subr.mxu0 0.0
    %804 = vmatpush1.msra.mxu0 0.0
    %805 = vmatprep.subr.mxu0 0.0
    %806 = vmatpush1.msra.mxu0 0.0
    %807 = vmatprep.mubr.f32.mxu0 0.0
    %808 = vmatmul.mubr.f32.gmra.mrb[0].mxu0 %v670
    %v809 = vpop.f32.mrb[0].mxu0
    %v810 = vadd.f32 0.0, %v809
    %v811 = vpop.f32.mrb[0].mxu0
    %v812 = vadd.f32 0.0, %v811
    %813 = vdwg.mxu0
    %v818 = vrot.slane %v739, 6
    %v819 = vrot.slane %v741, 6
    %v820 = vrot.slane %v810, 6
    %v821 = vrot.slane %v812, 6
    %v826 = vadd.f32 %v187, %v818
    %v827 = vadd.f32 %v189, %v819
    %v828 = vadd.f32 %v258, %v820
    %v829 = vadd.f32 %v260, %v821
    %v830 = vmul.f32 %v826, 0.5
    %v831 = vmul.f32 %v827, 0.5
    %v832 = vmul.f32 %v828, 0.5
    %v833 = vtanh.pop %v830
    %v834 = vtanh.pop %v831
    %v835 = vtanh.pop %v832
    %v836 = vmul.f32 %v833, 0.5
    %v837 = vmul.f32 %v834, 0.5
    %v838 = vmul.f32 %v835, 0.5
    %v839 = vadd.f32 %v836, 0.5
    %v840 = vadd.f32 %v837, 0.5
    %v841 = vadd.f32 %v838, 0.5
    %v842 = vtanh.pop %v829
    %v844 = vrot.slane %v666, 7
    %v846 = vmul.f32 %v840, %v844
    %v847 = vmul.f32 %v839, %v842
    %v848 = vadd.f32 %v846, %v847
    %v849 = vtanh.pop %v848
    %v850 = vmul.f32 %v841, %v849
    %v852 = vrot.slane %v850, 2
    %854 = vmatprep.subr.mxu0 %v263
    %855 = vmatpush1.msra.mxu0 %v262
    %856 = vmatprep.subr.mxu0 %v267
    %857 = vmatpush1.msra.mxu0 %v266
    %858 = vmatprep.subr.mxu0 %v271
    %859 = vmatpush1.msra.mxu0 %v270
    %860 = vmatprep.subr.mxu0 %v275
    %861 = vmatpush1.msra.mxu0 %v274
    %862 = vmatprep.subr.mxu0 %v279
    %863 = vmatpush1.msra.mxu0 %v278
    %864 = vmatprep.subr.mxu0 %v283
    %865 = vmatpush1.msra.mxu0 %v282
    %866 = vmatprep.subr.mxu0 %v287
    %867 = vmatpush1.msra.mxu0 %v286
    %868 = vmatprep.subr.mxu0 %v291
    %869 = vmatpush1.msra.mxu0 %v290
    %870 = vmatprep.subr.mxu0 %v295
    %871 = vmatpush1.msra.mxu0 %v294
    %872 = vmatprep.subr.mxu0 %v299
    %873 = vmatpush1.msra.mxu0 %v298
    %874 = vmatprep.subr.mxu0 %v303
    %875 = vmatpush1.msra.mxu0 %v302
    %876 = vmatprep.subr.mxu0 %v307
    %877 = vmatpush1.msra.mxu0 %v306
    %878 = vmatprep.subr.mxu0 %v311
    %879 = vmatpush1.msra.mxu0 %v310
    %880 = vmatprep.subr.mxu0 %v315
    %881 = vmatpush1.msra.mxu0 %v314
    %882 = vmatprep.subr.mxu0 %v319
    %883 = vmatpush1.msra.mxu0 %v318
    %884 = vmatprep.subr.mxu0 %v323
    %885 = vmatpush1.msra.mxu0 %v322
    %886 = vmatprep.subr.mxu0 0.0
    %887 = vmatpush1.msra.mxu0 0.0
    %888 = vmatprep.subr.mxu0 0.0
    %889 = vmatpush1.msra.mxu0 0.0
    %890 = vmatprep.subr.mxu0 0.0
    %891 = vmatpush1.msra.mxu0 0.0
    %892 = vmatprep.subr.mxu0 0.0
    %893 = vmatpush1.msra.mxu0 0.0
    %894 = vmatprep.subr.mxu0 0.0
    %895 = vmatpush1.msra.mxu0 0.0
    %896 = vmatprep.subr.mxu0 0.0
    %897 = vmatpush1.msra.mxu0 0.0
    %898 = vmatprep.subr.mxu0 0.0
    %899 = vmatpush1.msra.mxu0 0.0
    %900 = vmatprep.subr.mxu0 0.0
    %901 = vmatpush1.msra.mxu0 0.0
    %902 = vmatprep.subr.mxu0 0.0
    %903 = vmatpush1.msra.mxu0 0.0
    %904 = vmatprep.subr.mxu0 0.0
    %905 = vmatpush1.msra.mxu0 0.0
    %906 = vmatprep.subr.mxu0 0.0
    %907 = vmatpush1.msra.mxu0 0.0
    %908 = vmatprep.subr.mxu0 0.0
    %909 = vmatpush1.msra.mxu0 0.0
    %910 = vmatprep.subr.mxu0 0.0
    %911 = vmatpush1.msra.mxu0 0.0
    %912 = vmatprep.subr.mxu0 0.0
    %913 = vmatpush1.msra.mxu0 0.0
    %914 = vmatprep.subr.mxu0 0.0
    %915 = vmatpush1.msra.mxu0 0.0
    %916 = vmatprep.subr.mxu0 0.0
    %917 = vmatpush1.msra.mxu0 0.0
    %918 = vmatprep.mubr.f32.mxu0 0.0
    %919 = vmatmul.mubr.f32.gmra.mrb[0].mxu0 %v852
    %v920 = vpop.f32.mrb[0].mxu0
    %v921 = vadd.f32 0.0, %v920
    %v922 = vpop.f32.mrb[0].mxu0
    %v923 = vadd.f32 0.0, %v922
    %924 = vdwg.mxu0
    %925 = vmatprep.subr.mxu0 %v265
    %926 = vmatpush1.msra.mxu0 %v264
    %927 = vmatprep.subr.mxu0 %v269
    %928 = vmatpush1.msra.mxu0 %v268
    %929 = vmatprep.subr.mxu0 %v273
    %930 = vmatpush1.msra.mxu0 %v272
    %931 = vmatprep.subr.mxu0 %v277
    %932 = vmatpush1.msra.mxu0 %v276
    %933 = vmatprep.subr.mxu0 %v281
    %934 = vmatpush1.msra.mxu0 %v280
    %935 = vmatprep.subr.mxu0 %v285
    %936 = vmatpush1.msra.mxu0 %v284
    %937 = vmatprep.subr.mxu0 %v289
    %938 = vmatpush1.msra.mxu0 %v288
    %939 = vmatprep.subr.mxu0 %v293
    %940 = vmatpush1.msra.mxu0 %v292
    %941 = vmatprep.subr.mxu0 %v297
    %942 = vmatpush1.msra.mxu0 %v296
    %943 = vmatprep.subr.mxu0 %v301
    %944 = vmatpush1.msra.mxu0 %v300
    %945 = vmatprep.subr.mxu0 %v305
    %946 = vmatpush1.msra.mxu0 %v304
    %947 = vmatprep.subr.mxu0 %v309
    %948 = vmatpush1.msra.mxu0 %v308
    %949 = vmatprep.subr.mxu0 %v313
    %950 = vmatpush1.msra.mxu0 %v312
    %951 = vmatprep.subr.mxu0 %v317
    %952 = vmatpush1.msra.mxu0 %v316
    %953 = vmatprep.subr.mxu0 %v321
    %954 = vmatpush1.msra.mxu0 %v320
    %955 = vmatprep.subr.mxu0 %v325
    %956 = vmatpush1.msra.mxu0 %v324
    %957 = vmatprep.subr.mxu0 0.0
    %958 = vmatpush1.msra.mxu0 0.0
    %959 = vmatprep.subr.mxu0 0.0
    %960 = vmatpush1.msra.mxu0 0.0
    %961 = vmatprep.subr.mxu0 0.0
    %962 = vmatpush1.msra.mxu0 0.0
    %963 = vmatprep.subr.mxu0 0.0
    %964 = vmatpush1.msra.mxu0 0.0
    %965 = vmatprep.subr.mxu0 0.0
    %966 = vmatpush1.msra.mxu0 0.0
    %967 = vmatprep.subr.mxu0 0.0
    %968 = vmatpush1.msra.mxu0 0.0
    %969 = vmatprep.subr.mxu0 0.0
    %970 = vmatpush1.msra.mxu0 0.0
    %971 = vmatprep.subr.mxu0 0.0
    %972 = vmatpush1.msra.mxu0 0.0
    %973 = vmatprep.subr.mxu0 0.0
    %974 = vmatpush1.msra.mxu0 0.0
    %975 = vmatprep.subr.mxu0 0.0
    %976 = vmatpush1.msra.mxu0 0.0
    %977 = vmatprep.subr.mxu0 0.0
    %978 = vmatpush1.msra.mxu0 0.0
    %979 = vmatprep.subr.mxu0 0.0
    %980 = vmatpush1.msra.mxu0 0.0
    %981 = vmatprep.subr.mxu0 0.0
    %982 = vmatpush1.msra.mxu0 0.0
    %983 = vmatprep.subr.mxu0 0.0
    %984 = vmatpush1.msra.mxu0 0.0
    %985 = vmatprep.subr.mxu0 0.0
    %986 = vmatpush1.msra.mxu0 0.0
    %987 = vmatprep.subr.mxu0 0.0
    %988 = vmatpush1.msra.mxu0 0.0
    %989 = vmatprep.mubr.f32.mxu0 0.0
    %990 = vmatmul.mubr.f32.gmra.mrb[0].mxu0 %v852
    %v991 = vpop.f32.mrb[0].mxu0
    %v992 = vadd.f32 0.0, %v991
    %v993 = vpop.f32.mrb[0].mxu0
    %v994 = vadd.f32 0.0, %v993
    %995 = vdwg.mxu0
    %v1000 = vrot.slane %v921, 5
    %v1001 = vrot.slane %v923, 5
    %v1002 = vrot.slane %v992, 5
    %v1003 = vrot.slane %v994, 5
    %v1008 = vadd.f32 %v187, %v1000
    %v1009 = vadd.f32 %v189, %v1001
    %v1010 = vadd.f32 %v258, %v1002
    %v1011 = vadd.f32 %v260, %v1003
    %v1012 = vmul.f32 %v1008, 0.5
    %v1013 = vmul.f32 %v1009, 0.5
    %v1014 = vmul.f32 %v1010, 0.5
    %v1015 = vtanh.pop %v1012
    %v1016 = vtanh.pop %v1013
    %v1017 = vtanh.pop %v1014
    %v1018 = vmul.f32 %v1015, 0.5
    %v1019 = vmul.f32 %v1016, 0.5
    %v1020 = vmul.f32 %v1017, 0.5
    %v1021 = vadd.f32 %v1018, 0.5
    %v1022 = vadd.f32 %v1019, 0.5
    %v1023 = vadd.f32 %v1020, 0.5
    %v1024 = vtanh.pop %v1011
    %v1026 = vrot.slane %v848, 7
    %v1028 = vmul.f32 %v1022, %v1026
    %v1029 = vmul.f32 %v1021, %v1024
    %v1030 = vadd.f32 %v1028, %v1029
    %v1031 = vtanh.pop %v1030
    %v1032 = vmul.f32 %v1023, %v1031
    %v1034 = vrot.slane %v1032, 3
    %1036 = vmatprep.subr.mxu0 %v263
    %1037 = vmatpush1.msra.mxu0 %v262
    %1038 = vmatprep.subr.mxu0 %v267
    %1039 = vmatpush1.msra.mxu0 %v266
    %1040 = vmatprep.subr.mxu0 %v271
    %1041 = vmatpush1.msra.mxu0 %v270
    %1042 = vmatprep.subr.mxu0 %v275
    %1043 = vmatpush1.msra.mxu0 %v274
    %1044 = vmatprep.subr.mxu0 %v279
    %1045 = vmatpush1.msra.mxu0 %v278
    %1046 = vmatprep.subr.mxu0 %v283
    %1047 = vmatpush1.msra.mxu0 %v282
    %1048 = vmatprep.subr.mxu0 %v287
    %1049 = vmatpush1.msra.mxu0 %v286
    %1050 = vmatprep.subr.mxu0 %v291
    %1051 = vmatpush1.msra.mxu0 %v290
    %1052 = vmatprep.subr.mxu0 %v295
    %1053 = vmatpush1.msra.mxu0 %v294
    %1054 = vmatprep.subr.mxu0 %v299
    %1055 = vmatpush1.msra.mxu0 %v298
    %1056 = vmatprep.subr.mxu0 %v303
    %1057 = vmatpush1.msra.mxu0 %v302
    %1058 = vmatprep.subr.mxu0 %v307
    %1059 = vmatpush1.msra.mxu0 %v306
    %1060 = vmatprep.subr.mxu0 %v311
    %1061 = vmatpush1.msra.mxu0 %v310
    %1062 = vmatprep.subr.mxu0 %v315
    %1063 = vmatpush1.msra.mxu0 %v314
    %1064 = vmatprep.subr.mxu0 %v319
    %1065 = vmatpush1.msra.mxu0 %v318
    %1066 = vmatprep.subr.mxu0 %v323
    %1067 = vmatpush1.msra.mxu0 %v322
    %1068 = vmatprep.subr.mxu0 0.0
    %1069 = vmatpush1.msra.mxu0 0.0
    %1070 = vmatprep.subr.mxu0 0.0
    %1071 = vmatpush1.msra.mxu0 0.0
    %1072 = vmatprep.subr.mxu0 0.0
    %1073 = vmatpush1.msra.mxu0 0.0
    %1074 = vmatprep.subr.mxu0 0.0
    %1075 = vmatpush1.msra.mxu0 0.0
    %1076 = vmatprep.subr.mxu0 0.0
    %1077 = vmatpush1.msra.mxu0 0.0
    %1078 = vmatprep.subr.mxu0 0.0
    %1079 = vmatpush1.msra.mxu0 0.0
    %1080 = vmatprep.subr.mxu0 0.0
    %1081 = vmatpush1.msra.mxu0 0.0
    %1082 = vmatprep.subr.mxu0 0.0
    %1083 = vmatpush1.msra.mxu0 0.0
    %1084 = vmatprep.subr.mxu0 0.0
    %1085 = vmatpush1.msra.mxu0 0.0
    %1086 = vmatprep.subr.mxu0 0.0
    %1087 = vmatpush1.msra.mxu0 0.0
    %1088 = vmatprep.subr.mxu0 0.0
    %1089 = vmatpush1.msra.mxu0 0.0
    %1090 = vmatprep.subr.mxu0 0.0
    %1091 = vmatpush1.msra.mxu0 0.0
    %1092 = vmatprep.subr.mxu0 0.0
    %1093 = vmatpush1.msra.mxu0 0.0
    %1094 = vmatprep.subr.mxu0 0.0
    %1095 = vmatpush1.msra.mxu0 0.0
    %1096 = vmatprep.subr.mxu0 0.0
    %1097 = vmatpush1.msra.mxu0 0.0
    %1098 = vmatprep.subr.mxu0 0.0
    %1099 = vmatpush1.msra.mxu0 0.0
    %1100 = vmatprep.mubr.f32.mxu0 0.0
    %1101 = vmatmul.mubr.f32.gmra.mrb[0].mxu0 %v1034
    %v1102 = vpop.f32.mrb[0].mxu0
    %v1103 = vadd.f32 0.0, %v1102
    %v1104 = vpop.f32.mrb[0].mxu0
    %v1105 = vadd.f32 0.0, %v1104
    %1106 = vdwg.mxu0
    %1107 = vmatprep.subr.mxu0 %v265
    %1108 = vmatpush1.msra.mxu0 %v264
    %1109 = vmatprep.subr.mxu0 %v269
    %1110 = vmatpush1.msra.mxu0 %v268
    %1111 = vmatprep.subr.mxu0 %v273
    %1112 = vmatpush1.msra.mxu0 %v272
    %1113 = vmatprep.subr.mxu0 %v277
    %1114 = vmatpush1.msra.mxu0 %v276
    %1115 = vmatprep.subr.mxu0 %v281
    %1116 = vmatpush1.msra.mxu0 %v280
    %1117 = vmatprep.subr.mxu0 %v285
    %1118 = vmatpush1.msra.mxu0 %v284
    %1119 = vmatprep.subr.mxu0 %v289
    %1120 = vmatpush1.msra.mxu0 %v288
    %1121 = vmatprep.subr.mxu0 %v293
    %1122 = vmatpush1.msra.mxu0 %v292
    %1123 = vmatprep.subr.mxu0 %v297
    %1124 = vmatpush1.msra.mxu0 %v296
    %1125 = vmatprep.subr.mxu0 %v301
    %1126 = vmatpush1.msra.mxu0 %v300
    %1127 = vmatprep.subr.mxu0 %v305
    %1128 = vmatpush1.msra.mxu0 %v304
    %1129 = vmatprep.subr.mxu0 %v309
    %1130 = vmatpush1.msra.mxu0 %v308
    %1131 = vmatprep.subr.mxu0 %v313
    %1132 = vmatpush1.msra.mxu0 %v312
    %1133 = vmatprep.subr.mxu0 %v317
    %1134 = vmatpush1.msra.mxu0 %v316
    %1135 = vmatprep.subr.mxu0 %v321
    %1136 = vmatpush1.msra.mxu0 %v320
    %1137 = vmatprep.subr.mxu0 %v325
    %1138 = vmatpush1.msra.mxu0 %v324
    %1139 = vmatprep.subr.mxu0 0.0
    %1140 = vmatpush1.msra.mxu0 0.0
    %1141 = vmatprep.subr.mxu0 0.0
    %1142 = vmatpush1.msra.mxu0 0.0
    %1143 = vmatprep.subr.mxu0 0.0
    %1144 = vmatpush1.msra.mxu0 0.0
    %1145 = vmatprep.subr.mxu0 0.0
    %1146 = vmatpush1.msra.mxu0 0.0
    %1147 = vmatprep.subr.mxu0 0.0
    %1148 = vmatpush1.msra.mxu0 0.0
    %1149 = vmatprep.subr.mxu0 0.0
    %1150 = vmatpush1.msra.mxu0 0.0
    %1151 = vmatprep.subr.mxu0 0.0
    %1152 = vmatpush1.msra.mxu0 0.0
    %1153 = vmatprep.subr.mxu0 0.0
    %1154 = vmatpush1.msra.mxu0 0.0
    %1155 = vmatprep.subr.mxu0 0.0
    %1156 = vmatpush1.msra.mxu0 0.0
    %1157 = vmatprep.subr.mxu0 0.0
    %1158 = vmatpush1.msra.mxu0 0.0
    %1159 = vmatprep.subr.mxu0 0.0
    %1160 = vmatpush1.msra.mxu0 0.0
    %1161 = vmatprep.subr.mxu0 0.0
    %1162 = vmatpush1.msra.mxu0 0.0
    %1163 = vmatprep.subr.mxu0 0.0
    %1164 = vmatpush1.msra.mxu0 0.0
    %1165 = vmatprep.subr.mxu0 0.0
    %1166 = vmatpush1.msra.mxu0 0.0
    %1167 = vmatprep.subr.mxu0 0.0
    %1168 = vmatpush1.msra.mxu0 0.0
    %1169 = vmatprep.subr.mxu0 0.0
    %1170 = vmatpush1.msra.mxu0 0.0
    %1171 = vmatprep.mubr.f32.mxu0 0.0
    %1172 = vmatmul.mubr.f32.gmra.mrb[0].mxu0 %v1034
    %v1173 = vpop.f32.mrb[0].mxu0
    %v1174 = vadd.f32 0.0, %v1173
    %v1175 = vpop.f32.mrb[0].mxu0
    %v1176 = vadd.f32 0.0, %v1175
    %1177 = vdwg.mxu0
    %v1182 = vrot.slane %v1103, 4
    %v1183 = vrot.slane %v1105, 4
    %v1184 = vrot.slane %v1174, 4
    %v1185 = vrot.slane %v1176, 4
    %v1190 = vadd.f32 %v187, %v1182
    %v1191 = vadd.f32 %v189, %v1183
    %v1192 = vadd.f32 %v258, %v1184
    %v1193 = vadd.f32 %v260, %v1185
    %v1194 = vmul.f32 %v1190, 0.5
    %v1195 = vmul.f32 %v1191, 0.5
    %v1196 = vmul.f32 %v1192, 0.5
    %v1197 = vtanh.pop %v1194
    %v1198 = vtanh.pop %v1195
    %v1199 = vtanh.pop %v1196
    %v1200 = vmul.f32 %v1197, 0.5
    %v1201 = vmul.f32 %v1198, 0.5
    %v1202 = vmul.f32 %v1199, 0.5
    %v1203 = vadd.f32 %v1200, 0.5
    %v1204 = vadd.f32 %v1201, 0.5
    %v1205 = vadd.f32 %v1202, 0.5
    %v1206 = vtanh.pop %v1193
    %v1208 = vrot.slane %v1030, 7
    %v1210 = vmul.f32 %v1204, %v1208
    %v1211 = vmul.f32 %v1203, %v1206
    %v1212 = vadd.f32 %v1210, %v1211
    %v1213 = vtanh.pop %v1212
    %v1214 = vmul.f32 %v1205, %v1213
    %v1216 = vrot.slane %v1214, 4
    %1218 = vmatprep.subr.mxu0 %v263
    %1219 = vmatpush1.msra.mxu0 %v262
    %1220 = vmatprep.subr.mxu0 %v267
    %1221 = vmatpush1.msra.mxu0 %v266
    %1222 = vmatprep.subr.mxu0 %v271
    %1223 = vmatpush1.msra.mxu0 %v270
    %1224 = vmatprep.subr.mxu0 %v275
    %1225 = vmatpush1.msra.mxu0 %v274
    %1226 = vmatprep.subr.mxu0 %v279
    %1227 = vmatpush1.msra.mxu0 %v278
    %1228 = vmatprep.subr.mxu0 %v283
    %1229 = vmatpush1.msra.mxu0 %v282
    %1230 = vmatprep.subr.mxu0 %v287
    %1231 = vmatpush1.msra.mxu0 %v286
    %1232 = vmatprep.subr.mxu0 %v291
    %1233 = vmatpush1.msra.mxu0 %v290
    %1234 = vmatprep.subr.mxu0 %v295
    %1235 = vmatpush1.msra.mxu0 %v294
    %1236 = vmatprep.subr.mxu0 %v299
    %1237 = vmatpush1.msra.mxu0 %v298
    %1238 = vmatprep.subr.mxu0 %v303
    %1239 = vmatpush1.msra.mxu0 %v302
    %1240 = vmatprep.subr.mxu0 %v307
    %1241 = vmatpush1.msra.mxu0 %v306
    %1242 = vmatprep.subr.mxu0 %v311
    %1243 = vmatpush1.msra.mxu0 %v310
    %1244 = vmatprep.subr.mxu0 %v315
    %1245 = vmatpush1.msra.mxu0 %v314
    %1246 = vmatprep.subr.mxu0 %v319
    %1247 = vmatpush1.msra.mxu0 %v318
    %1248 = vmatprep.subr.mxu0 %v323
    %1249 = vmatpush1.msra.mxu0 %v322
    %1250 = vmatprep.subr.mxu0 0.0
    %1251 = vmatpush1.msra.mxu0 0.0
    %1252 = vmatprep.subr.mxu0 0.0
    %1253 = vmatpush1.msra.mxu0 0.0
    %1254 = vmatprep.subr.mxu0 0.0
    %1255 = vmatpush1.msra.mxu0 0.0
    %1256 = vmatprep.subr.mxu0 0.0
    %1257 = vmatpush1.msra.mxu0 0.0
    %1258 = vmatprep.subr.mxu0 0.0
    %1259 = vmatpush1.msra.mxu0 0.0
    %1260 = vmatprep.subr.mxu0 0.0
    %1261 = vmatpush1.msra.mxu0 0.0
    %1262 = vmatprep.subr.mxu0 0.0
    %1263 = vmatpush1.msra.mxu0 0.0
    %1264 = vmatprep.subr.mxu0 0.0
    %1265 = vmatpush1.msra.mxu0 0.0
    %1266 = vmatprep.subr.mxu0 0.0
    %1267 = vmatpush1.msra.mxu0 0.0
    %1268 = vmatprep.subr.mxu0 0.0
    %1269 = vmatpush1.msra.mxu0 0.0
    %1270 = vmatprep.subr.mxu0 0.0
    %1271 = vmatpush1.msra.mxu0 0.0
    %1272 = vmatprep.subr.mxu0 0.0
    %1273 = vmatpush1.msra.mxu0 0.0
    %1274 = vmatprep.subr.mxu0 0.0
    %1275 = vmatpush1.msra.mxu0 0.0
    %1276 = vmatprep.subr.mxu0 0.0
    %1277 = vmatpush1.msra.mxu0 0.0
    %1278 = vmatprep.subr.mxu0 0.0
    %1279 = vmatpush1.msra.mxu0 0.0
    %1280 = vmatprep.subr.mxu0 0.0
    %1281 = vmatpush1.msra.mxu0 0.0
    %1282 = vmatprep.mubr.f32.mxu0 0.0
    %1283 = vmatmul.mubr.f32.gmra.mrb[0].mxu0 %v1216
    %v1284 = vpop.f32.mrb[0].mxu0
    %v1285 = vadd.f32 0.0, %v1284
    %v1286 = vpop.f32.mrb[0].mxu0
    %v1287 = vadd.f32 0.0, %v1286
    %1288 = vdwg.mxu0
    %1289 = vmatprep.subr.mxu0 %v265
    %1290 = vmatpush1.msra.mxu0 %v264
    %1291 = vmatprep.subr.mxu0 %v269
    %1292 = vmatpush1.msra.mxu0 %v268
    %1293 = vmatprep.subr.mxu0 %v273
    %1294 = vmatpush1.msra.mxu0 %v272
    %1295 = vmatprep.subr.mxu0 %v277
    %1296 = vmatpush1.msra.mxu0 %v276
    %1297 = vmatprep.subr.mxu0 %v281
    %1298 = vmatpush1.msra.mxu0 %v280
    %1299 = vmatprep.subr.mxu0 %v285
    %1300 = vmatpush1.msra.mxu0 %v284
    %1301 = vmatprep.subr.mxu0 %v289
    %1302 = vmatpush1.msra.mxu0 %v288
    %1303 = vmatprep.subr.mxu0 %v293
    %1304 = vmatpush1.msra.mxu0 %v292
    %1305 = vmatprep.subr.mxu0 %v297
    %1306 = vmatpush1.msra.mxu0 %v296
    %1307 = vmatprep.subr.mxu0 %v301
    %1308 = vmatpush1.msra.mxu0 %v300
    %1309 = vmatprep.subr.mxu0 %v305
    %1310 = vmatpush1.msra.mxu0 %v304
    %1311 = vmatprep.subr.mxu0 %v309
    %1312 = vmatpush1.msra.mxu0 %v308
    %1313 = vmatprep.subr.mxu0 %v313
    %1314 = vmatpush1.msra.mxu0 %v312
    %1315 = vmatprep.subr.mxu0 %v317
    %1316 = vmatpush1.msra.mxu0 %v316
    %1317 = vmatprep.subr.mxu0 %v321
    %1318 = vmatpush1.msra.mxu0 %v320
    %1319 = vmatprep.subr.mxu0 %v325
    %1320 = vmatpush1.msra.mxu0 %v324
    %1321 = vmatprep.subr.mxu0 0.0
    %1322 = vmatpush1.msra.mxu0 0.0
    %1323 = vmatprep.subr.mxu0 0.0
    %1324 = vmatpush1.msra.mxu0 0.0
    %1325 = vmatprep.subr.mxu0 0.0
    %1326 = vmatpush1.msra.mxu0 0.0
    %1327 = vmatprep.subr.mxu0 0.0
    %1328 = vmatpush1.msra.mxu0 0.0
    %1329 = vmatprep.subr.mxu0 0.0
    %1330 = vmatpush1.msra.mxu0 0.0
    %1331 = vmatprep.subr.mxu0 0.0
    %1332 = vmatpush1.msra.mxu0 0.0
    %1333 = vmatprep.subr.mxu0 0.0
    %1334 = vmatpush1.msra.mxu0 0.0
    %1335 = vmatprep.subr.mxu0 0.0
    %1336 = vmatpush1.msra.mxu0 0.0
    %1337 = vmatprep.subr.mxu0 0.0
    %1338 = vmatpush1.msra.mxu0 0.0
    %1339 = vmatprep.subr.mxu0 0.0
    %1340 = vmatpush1.msra.mxu0 0.0
    %1341 = vmatprep.subr.mxu0 0.0
    %1342 = vmatpush1.msra.mxu0 0.0
    %1343 = vmatprep.subr.mxu0 0.0
    %1344 = vmatpush1.msra.mxu0 0.0
    %1345 = vmatprep.subr.mxu0 0.0
    %1346 = vmatpush1.msra.mxu0 0.0
    %1347 = vmatprep.subr.mxu0 0.0
    %1348 = vmatpush1.msra.mxu0 0.0
    %1349 = vmatprep.subr.mxu0 0.0
    %1350 = vmatpush1.msra.mxu0 0.0
    %1351 = vmatprep.subr.mxu0 0.0
    %1352 = vmatpush1.msra.mxu0 0.0
    %1353 = vmatprep.mubr.f32.mxu0 0.0
    %1354 = vmatmul.mubr.f32.gmra.mrb[0].mxu0 %v1216
    %v1355 = vpop.f32.mrb[0].mxu0
    %v1356 = vadd.f32 0.0, %v1355
    %v1357 = vpop.f32.mrb[0].mxu0
    %v1358 = vadd.f32 0.0, %v1357
    %1359 = vdwg.mxu0
    %v1364 = vrot.slane %v1285, 3
    %v1365 = vrot.slane %v1287, 3
    %v1366 = vrot.slane %v1356, 3
    %v1367 = vrot.slane %v1358, 3
    %v1372 = vadd.f32 %v187, %v1364
    %v1373 = vadd.f32 %v189, %v1365
    %v1374 = vadd.f32 %v258, %v1366
    %v1375 = vadd.f32 %v260, %v1367
    %v1376 = vmul.f32 %v1372, 0.5
    %v1377 = vmul.f32 %v1373, 0.5
    %v1378 = vmul.f32 %v1374, 0.5
    %v1379 = vtanh.pop %v1376
    %v1380 = vtanh.pop %v1377
    %v1381 = vtanh.pop %v1378
    %v1382 = vmul.f32 %v1379, 0.5
    %v1383 = vmul.f32 %v1380, 0.5
    %v1384 = vmul.f32 %v1381, 0.5
    %v1385 = vadd.f32 %v1382, 0.5
    %v1386 = vadd.f32 %v1383, 0.5
    %v1387 = vadd.f32 %v1384, 0.5
    %v1388 = vtanh.pop %v1375
    %v1390 = vrot.slane %v1212, 7
    %v1392 = vmul.f32 %v1386, %v1390
    %v1393 = vmul.f32 %v1385, %v1388
    %v1394 = vadd.f32 %v1392, %v1393
    %v1395 = vtanh.pop %v1394
    %v1396 = vmul.f32 %v1387, %v1395
    %v1398 = vrot.slane %v1396, 5
    %1400 = vmatprep.subr.mxu0 %v263
    %1401 = vmatpush1.msra.mxu0 %v262
    %1402 = vmatprep.subr.mxu0 %v267
    %1403 = vmatpush1.msra.mxu0 %v266
    %1404 = vmatprep.subr.mxu0 %v271
    %1405 = vmatpush1.msra.mxu0 %v270
    %1406 = vmatprep.subr.mxu0 %v275
    %1407 = vmatpush1.msra.mxu0 %v274
    %1408 = vmatprep.subr.mxu0 %v279
    %1409 = vmatpush1.msra.mxu0 %v278
    %1410 = vmatprep.subr.mxu0 %v283
    %1411 = vmatpush1.msra.mxu0 %v282
    %1412 = vmatprep.subr.mxu0 %v287
    %1413 = vmatpush1.msra.mxu0 %v286
    %1414 = vmatprep.subr.mxu0 %v291
    %1415 = vmatpush1.msra.mxu0 %v290
    %1416 = vmatprep.subr.mxu0 %v295
    %1417 = vmatpush1.msra.mxu0 %v294
    %1418 = vmatprep.subr.mxu0 %v299
    %1419 = vmatpush1.msra.mxu0 %v298
    %1420 = vmatprep.subr.mxu0 %v303
    %1421 = vmatpush1.msra.mxu0 %v302
    %1422 = vmatprep.subr.mxu0 %v307
    %1423 = vmatpush1.msra.mxu0 %v306
    %1424 = vmatprep.subr.mxu0 %v311
    %1425 = vmatpush1.msra.mxu0 %v310
    %1426 = vmatprep.subr.mxu0 %v315
    %1427 = vmatpush1.msra.mxu0 %v314
    %1428 = vmatprep.subr.mxu0 %v319
    %1429 = vmatpush1.msra.mxu0 %v318
    %1430 = vmatprep.subr.mxu0 %v323
    %1431 = vmatpush1.msra.mxu0 %v322
    %1432 = vmatprep.subr.mxu0 0.0
    %1433 = vmatpush1.msra.mxu0 0.0
    %1434 = vmatprep.subr.mxu0 0.0
    %1435 = vmatpush1.msra.mxu0 0.0
    %1436 = vmatprep.subr.mxu0 0.0
    %1437 = vmatpush1.msra.mxu0 0.0
    %1438 = vmatprep.subr.mxu0 0.0
    %1439 = vmatpush1.msra.mxu0 0.0
    %1440 = vmatprep.subr.mxu0 0.0
    %1441 = vmatpush1.msra.mxu0 0.0
    %1442 = vmatprep.subr.mxu0 0.0
    %1443 = vmatpush1.msra.mxu0 0.0
    %1444 = vmatprep.subr.mxu0 0.0
    %1445 = vmatpush1.msra.mxu0 0.0
    %1446 = vmatprep.subr.mxu0 0.0
    %1447 = vmatpush1.msra.mxu0 0.0
    %1448 = vmatprep.subr.mxu0 0.0
    %1449 = vmatpush1.msra.mxu0 0.0
    %1450 = vmatprep.subr.mxu0 0.0
    %1451 = vmatpush1.msra.mxu0 0.0
    %1452 = vmatprep.subr.mxu0 0.0
    %1453 = vmatpush1.msra.mxu0 0.0
    %1454 = vmatprep.subr.mxu0 0.0
    %1455 = vmatpush1.msra.mxu0 0.0
    %1456 = vmatprep.subr.mxu0 0.0
    %1457 = vmatpush1.msra.mxu0 0.0
    %1458 = vmatprep.subr.mxu0 0.0
    %1459 = vmatpush1.msra.mxu0 0.0
    %1460 = vmatprep.subr.mxu0 0.0
    %1461 = vmatpush1.msra.mxu0 0.0
    %1462 = vmatprep.subr.mxu0 0.0
    %1463 = vmatpush1.msra.mxu0 0.0
    %1464 = vmatprep.mubr.f32.mxu0 0.0
    %1465 = vmatmul.mubr.f32.gmra.mrb[0].mxu0 %v1398
    %v1466 = vpop.f32.mrb[0].mxu0
    %v1467 = vadd.f32 0.0, %v1466
    %v1468 = vpop.f32.mrb[0].mxu0
    %v1469 = vadd.f32 0.0, %v1468
    %1470 = vdwg.mxu0
    %1471 = vmatprep.subr.mxu0 %v265
    %1472 = vmatpush1.msra.mxu0 %v264
    %1473 = vmatprep.subr.mxu0 %v269
    %1474 = vmatpush1.msra.mxu0 %v268
    %1475 = vmatprep.subr.mxu0 %v273
    %1476 = vmatpush1.msra.mxu0 %v272
    %1477 = vmatprep.subr.mxu0 %v277
    %1478 = vmatpush1.msra.mxu0 %v276
    %1479 = vmatprep.subr.mxu0 %v281
    %1480 = vmatpush1.msra.mxu0 %v280
    %1481 = vmatprep.subr.mxu0 %v285
    %1482 = vmatpush1.msra.mxu0 %v284
    %1483 = vmatprep.subr.mxu0 %v289
    %1484 = vmatpush1.msra.mxu0 %v288
    %1485 = vmatprep.subr.mxu0 %v293
    %1486 = vmatpush1.msra.mxu0 %v292
    %1487 = vmatprep.subr.mxu0 %v297
    %1488 = vmatpush1.msra.mxu0 %v296
    %1489 = vmatprep.subr.mxu0 %v301
    %1490 = vmatpush1.msra.mxu0 %v300
    %1491 = vmatprep.subr.mxu0 %v305
    %1492 = vmatpush1.msra.mxu0 %v304
    %1493 = vmatprep.subr.mxu0 %v309
    %1494 = vmatpush1.msra.mxu0 %v308
    %1495 = vmatprep.subr.mxu0 %v313
    %1496 = vmatpush1.msra.mxu0 %v312
    %1497 = vmatprep.subr.mxu0 %v317
    %1498 = vmatpush1.msra.mxu0 %v316
    %1499 = vmatprep.subr.mxu0 %v321
    %1500 = vmatpush1.msra.mxu0 %v320
    %1501 = vmatprep.subr.mxu0 %v325
    %1502 = vmatpush1.msra.mxu0 %v324
    %1503 = vmatprep.subr.mxu0 0.0
    %1504 = vmatpush1.msra.mxu0 0.0
    %1505 = vmatprep.subr.mxu0 0.0
    %1506 = vmatpush1.msra.mxu0 0.0
    %1507 = vmatprep.subr.mxu0 0.0
    %1508 = vmatpush1.msra.mxu0 0.0
    %1509 = vmatprep.subr.mxu0 0.0
    %1510 = vmatpush1.msra.mxu0 0.0
    %1511 = vmatprep.subr.mxu0 0.0
    %1512 = vmatpush1.msra.mxu0 0.0
    %1513 = vmatprep.subr.mxu0 0.0
    %1514 = vmatpush1.msra.mxu0 0.0
    %1515 = vmatprep.subr.mxu0 0.0
    %1516 = vmatpush1.msra.mxu0 0.0
    %1517 = vmatprep.subr.mxu0 0.0
    %1518 = vmatpush1.msra.mxu0 0.0
    %1519 = vmatprep.subr.mxu0 0.0
    %1520 = vmatpush1.msra.mxu0 0.0
    %1521 = vmatprep.subr.mxu0 0.0
    %1522 = vmatpush1.msra.mxu0 0.0
    %1523 = vmatprep.subr.mxu0 0.0
    %1524 = vmatpush1.msra.mxu0 0.0
    %1525 = vmatprep.subr.mxu0 0.0
    %1526 = vmatpush1.msra.mxu0 0.0
    %1527 = vmatprep.subr.mxu0 0.0
    %1528 = vmatpush1.msra.mxu0 0.0
    %1529 = vmatprep.subr.mxu0 0.0
    %1530 = vmatpush1.msra.mxu0 0.0
    %1531 = vmatprep.subr.mxu0 0.0
    %1532 = vmatpush1.msra.mxu0 0.0
    %1533 = vmatprep.subr.mxu0 0.0
    %1534 = vmatpush1.msra.mxu0 0.0
    %1535 = vmatprep.mubr.f32.mxu0 0.0
    %1536 = vmatmul.mubr.f32.gmra.mrb[0].mxu0 %v1398
    %v1537 = vpop.f32.mrb[0].mxu0
    %v1538 = vadd.f32 0.0, %v1537
    %v1539 = vpop.f32.mrb[0].mxu0
    %v1540 = vadd.f32 0.0, %v1539
    %1541 = vdwg.mxu0
    %v1546 = vrot.slane %v1467, 2
    %v1547 = vrot.slane %v1469, 2
    %v1548 = vrot.slane %v1538, 2
    %v1549 = vrot.slane %v1540, 2
    %v1554 = vadd.f32 %v187, %v1546
    %v1555 = vadd.f32 %v189, %v1547
    %v1556 = vadd.f32 %v258, %v1548
    %v1557 = vadd.f32 %v260, %v1549
    %v1558 = vmul.f32 %v1554, 0.5
    %v1559 = vmul.f32 %v1555, 0.5
    %v1560 = vmul.f32 %v1556, 0.5
    %v1561 = vtanh.pop %v1558
    %v1562 = vtanh.pop %v1559
    %v1563 = vtanh.pop %v1560
    %v1564 = vmul.f32 %v1561, 0.5
    %v1565 = vmul.f32 %v1562, 0.5
    %v1566 = vmul.f32 %v1563, 0.5
    %v1567 = vadd.f32 %v1564, 0.5
    %v1568 = vadd.f32 %v1565, 0.5
    %v1569 = vadd.f32 %v1566, 0.5
    %v1570 = vtanh.pop %v1557
    %v1572 = vrot.slane %v1394, 7
    %v1574 = vmul.f32 %v1568, %v1572
    %v1575 = vmul.f32 %v1567, %v1570
    %v1576 = vadd.f32 %v1574, %v1575
    %v1577 = vtanh.pop %v1576
    %v1578 = vmul.f32 %v1569, %v1577
    %v1580 = vrot.slane %v1578, 6
    %1582 = vmatprep.subr.mxu0 %v263
    %1583 = vmatpush1.msra.mxu0 %v262
    %1584 = vmatprep.subr.mxu0 %v267
    %1585 = vmatpush1.msra.mxu0 %v266
    %1586 = vmatprep.subr.mxu0 %v271
    %1587 = vmatpush1.msra.mxu0 %v270
    %1588 = vmatprep.subr.mxu0 %v275
    %1589 = vmatpush1.msra.mxu0 %v274
    %1590 = vmatprep.subr.mxu0 %v279
    %1591 = vmatpush1.msra.mxu0 %v278
    %1592 = vmatprep.subr.mxu0 %v283
    %1593 = vmatpush1.msra.mxu0 %v282
    %1594 = vmatprep.subr.mxu0 %v287
    %1595 = vmatpush1.msra.mxu0 %v286
    %1596 = vmatprep.subr.mxu0 %v291
    %1597 = vmatpush1.msra.mxu0 %v290
    %1598 = vmatprep.subr.mxu0 %v295
    %1599 = vmatpush1.msra.mxu0 %v294
    %1600 = vmatprep.subr.mxu0 %v299
    %1601 = vmatpush1.msra.mxu0 %v298
    %1602 = vmatprep.subr.mxu0 %v303
    %1603 = vmatpush1.msra.mxu0 %v302
    %1604 = vmatprep.subr.mxu0 %v307
    %1605 = vmatpush1.msra.mxu0 %v306
    %1606 = vmatprep.subr.mxu0 %v311
    %1607 = vmatpush1.msra.mxu0 %v310
    %1608 = vmatprep.subr.mxu0 %v315
    %1609 = vmatpush1.msra.mxu0 %v314
    %1610 = vmatprep.subr.mxu0 %v319
    %1611 = vmatpush1.msra.mxu0 %v318
    %1612 = vmatprep.subr.mxu0 %v323
    %1613 = vmatpush1.msra.mxu0 %v322
    %1614 = vmatprep.subr.mxu0 0.0
    %1615 = vmatpush1.msra.mxu0 0.0
    %1616 = vmatprep.subr.mxu0 0.0
    %1617 = vmatpush1.msra.mxu0 0.0
    %1618 = vmatprep.subr.mxu0 0.0
    %1619 = vmatpush1.msra.mxu0 0.0
    %1620 = vmatprep.subr.mxu0 0.0
    %1621 = vmatpush1.msra.mxu0 0.0
    %1622 = vmatprep.subr.mxu0 0.0
    %1623 = vmatpush1.msra.mxu0 0.0
    %1624 = vmatprep.subr.mxu0 0.0
    %1625 = vmatpush1.msra.mxu0 0.0
    %1626 = vmatprep.subr.mxu0 0.0
    %1627 = vmatpush1.msra.mxu0 0.0
    %1628 = vmatprep.subr.mxu0 0.0
    %1629 = vmatpush1.msra.mxu0 0.0
    %1630 = vmatprep.subr.mxu0 0.0
    %1631 = vmatpush1.msra.mxu0 0.0
    %1632 = vmatprep.subr.mxu0 0.0
    %1633 = vmatpush1.msra.mxu0 0.0
    %1634 = vmatprep.subr.mxu0 0.0
    %1635 = vmatpush1.msra.mxu0 0.0
    %1636 = vmatprep.subr.mxu0 0.0
    %1637 = vmatpush1.msra.mxu0 0.0
    %1638 = vmatprep.subr.mxu0 0.0
    %1639 = vmatpush1.msra.mxu0 0.0
    %1640 = vmatprep.subr.mxu0 0.0
    %1641 = vmatpush1.msra.mxu0 0.0
    %1642 = vmatprep.subr.mxu0 0.0
    %1643 = vmatpush1.msra.mxu0 0.0
    %1644 = vmatprep.subr.mxu0 0.0
    %1645 = vmatpush1.msra.mxu0 0.0
    %1646 = vmatprep.mubr.f32.mxu0 0.0
    %1647 = vmatmul.mubr.f32.gmra.mrb[0].mxu0 %v1580
    %v1648 = vpop.f32.mrb[0].mxu0
    %v1649 = vadd.f32 0.0, %v1648
    %v1650 = vpop.f32.mrb[0].mxu0
    %v1651 = vadd.f32 0.0, %v1650
    %1652 = vdwg.mxu0
    %1653 = vmatprep.subr.mxu0 %v265
    %1654 = vmatpush1.msra.mxu0 %v264
    %1655 = vmatprep.subr.mxu0 %v269
    %1656 = vmatpush1.msra.mxu0 %v268
    %1657 = vmatprep.subr.mxu0 %v273
    %1658 = vmatpush1.msra.mxu0 %v272
    %1659 = vmatprep.subr.mxu0 %v277
    %1660 = vmatpush1.msra.mxu0 %v276
    %1661 = vmatprep.subr.mxu0 %v281
    %1662 = vmatpush1.msra.mxu0 %v280
    %1663 = vmatprep.subr.mxu0 %v285
    %1664 = vmatpush1.msra.mxu0 %v284
    %1665 = vmatprep.subr.mxu0 %v289
    %1666 = vmatpush1.msra.mxu0 %v288
    %1667 = vmatprep.subr.mxu0 %v293
    %1668 = vmatpush1.msra.mxu0 %v292
    %1669 = vmatprep.subr.mxu0 %v297
    %1670 = vmatpush1.msra.mxu0 %v296
    %1671 = vmatprep.subr.mxu0 %v301
    %1672 = vmatpush1.msra.mxu0 %v300
    %1673 = vmatprep.subr.mxu0 %v305
    %1674 = vmatpush1.msra.mxu0 %v304
    %1675 = vmatprep.subr.mxu0 %v309
    %1676 = vmatpush1.msra.mxu0 %v308
    %1677 = vmatprep.subr.mxu0 %v313
    %1678 = vmatpush1.msra.mxu0 %v312
    %1679 = vmatprep.subr.mxu0 %v317
    %1680 = vmatpush1.msra.mxu0 %v316
    %1681 = vmatprep.subr.mxu0 %v321
    %1682 = vmatpush1.msra.mxu0 %v320
    %1683 = vmatprep.subr.mxu0 %v325
    %1684 = vmatpush1.msra.mxu0 %v324
    %1685 = vmatprep.subr.mxu0 0.0
    %1686 = vmatpush1.msra.mxu0 0.0
    %1687 = vmatprep.subr.mxu0 0.0
    %1688 = vmatpush1.msra.mxu0 0.0
    %1689 = vmatprep.subr.mxu0 0.0
    %1690 = vmatpush1.msra.mxu0 0.0
    %1691 = vmatprep.subr.mxu0 0.0
    %1692 = vmatpush1.msra.mxu0 0.0
    %1693 = vmatprep.subr.mxu0 0.0
    %1694 = vmatpush1.msra.mxu0 0.0
    %1695 = vmatprep.subr.mxu0 0.0
    %1696 = vmatpush1.msra.mxu0 0.0
    %1697 = vmatprep.subr.mxu0 0.0
    %1698 = vmatpush1.msra.mxu0 0.0
    %1699 = vmatprep.subr.mxu0 0.0
    %1700 = vmatpush1.msra.mxu0 0.0
    %1701 = vmatprep.subr.mxu0 0.0
    %1702 = vmatpush1.msra.mxu0 0.0
    %1703 = vmatprep.subr.mxu0 0.0
    %1704 = vmatpush1.msra.mxu0 0.0
    %1705 = vmatprep.subr.mxu0 0.0
    %1706 = vmatpush1.msra.mxu0 0.0
    %1707 = vmatprep.subr.mxu0 0.0
    %1708 = vmatpush1.msra.mxu0 0.0
    %1709 = vmatprep.subr.mxu0 0.0
    %1710 = vmatpush1.msra.mxu0 0.0
    %1711 = vmatprep.subr.mxu0 0.0
    %1712 = vmatpush1.msra.mxu0 0.0
    %1713 = vmatprep.subr.mxu0 0.0
    %1714 = vmatpush1.msra.mxu0 0.0
    %1715 = vmatprep.subr.mxu0 0.0
    %1716 = vmatpush1.msra.mxu0 0.0
    %1717 = vmatprep.mubr.f32.mxu0 0.0
    %1718 = vmatmul.mubr.f32.gmra.mrb[0].mxu0 %v1580
    %v1719 = vpop.f32.mrb[0].mxu0
    %v1720 = vadd.f32 0.0, %v1719
    %v1721 = vpop.f32.mrb[0].mxu0
    %v1722 = vadd.f32 0.0, %v1721
    %1723 = vdwg.mxu0
    %v1728 = vrot.slane %v1649, 1
    %v1729 = vrot.slane %v1651, 1
    %v1730 = vrot.slane %v1720, 1
    %v1731 = vrot.slane %v1722, 1
    %v1736 = vadd.f32 %v187, %v1728
    %v1737 = vadd.f32 %v189, %v1729
    %v1738 = vadd.f32 %v258, %v1730
    %v1739 = vadd.f32 %v260, %v1731
    %v1740 = vmul.f32 %v1736, 0.5
    %v1741 = vmul.f32 %v1737, 0.5
    %v1742 = vmul.f32 %v1738, 0.5
    %v1743 = vtanh.pop %v1740
    %v1744 = vtanh.pop %v1741
    %v1745 = vtanh.pop %v1742
    %v1746 = vmul.f32 %v1743, 0.5
    %v1747 = vmul.f32 %v1744, 0.5
    %v1748 = vmul.f32 %v1745, 0.5
    %v1749 = vadd.f32 %v1746, 0.5
    %v1750 = vadd.f32 %v1747, 0.5
    %v1751 = vadd.f32 %v1748, 0.5
    %v1752 = vtanh.pop %v1739
    %v1754 = vrot.slane %v1576, 7
    %v1756 = vmul.f32 %v1750, %v1754
    %v1757 = vmul.f32 %v1749, %v1752
    %v1758 = vadd.f32 %v1756, %v1757
    %v1759 = vtanh.pop %v1758
    %v1760 = vmul.f32 %v1751, %v1759
    %vm1761 = vcmask 1040384
    %v1762 = vsel %vm1761, %v489, %v668
    %vm1763 = vcmask 1041408
    %v1764 = vsel %vm1763, %v1762, %v850
    %vm1765 = vcmask 1042432
    %v1766 = vsel %vm1765, %v1764, %v1032
    %vm1767 = vcmask 1043456
    %v1768 = vsel %vm1767, %v1766, %v1214
    %vm1769 = vcmask 1044480
    %v1770 = vsel %vm1769, %v1768, %v1396
    %vm1771 = vcmask 1045504
    %v1772 = vsel %vm1771, %v1770, %v1578
    %vm1773 = vcmask 1046528
    %v1774 = vsel %vm1773, %v1772, %v1760
    %v1775 = vmax.f32 %v1774, 0.0
    %v1776 = vrot.slane %v1775, 4
    %v1777 = vadd.f32 %v1775, %v1776
    %v1778 = vrot.slane %v1777, 2
    %v1779 = vadd.f32 %v1777, %v1778
    %v1780 = vrot.slane %v1779, 1
    %v1781 = vadd.f32 %v1779, %v1780
    %v1782 = vmul.f32 %v1781, %v65
    %v1783 = vsub.f32 %v1775, %v1782
    %v1784 = vmul.f32 %v1783, %v1783
    %v1785 = vrot.slane %v1784, 4
    %v1786 = vadd.f32 %v1784, %v1785
    %v1787 = vrot.slane %v1786, 2
    %v1788 = vadd.f32 %v1786, %v1787
    %v1789 = vrot.slane %v1788, 1
    %v1790 = vadd.f32 %v1788, %v1789
    %v1791 = vmul.f32 %v1790, %v65
    %v1792 = vld [vmem:[#allocation7 + $0x82] sm:$0x1]
    %v1793 = vld [vmem:[#allocation7 + $0x83] sm:$0x1]
    %v1794 = vadd.f32 %v1791, 1e-05
    %v1795 = vrsqrt.pop %v1794
    %v1796 = vmul.f32 %v1783, %v1795
    %v1797 = vlaneseq
    %v1798 = vshrl.u32 %v1797, 7
    %v1799 = vsub.s32 0, %v1798
    %v1800 = vrot.slane %v1792, %v1799
    %v1801 = vmul.f32 %v1796, %v1800
    %v1802 = vlaneseq
    %v1803 = vshrl.u32 %v1802, 7
    %v1804 = vsub.s32 0, %v1803
    %v1805 = vrot.slane %v1793, %v1804
    %v1806 = vadd.f32 %v1801, %v1805
    %v1807 = vld [vmem:[#allocation7] sm:$0xff]
    %v1808 = vld [vmem:[#allocation7 + $0x8] sm:$0xff]
    %v1809 = vld [vmem:[#allocation7 + $0x10] sm:$0xff]
    %v1810 = vld [vmem:[#allocation7 + $0x18] sm:$0xff]
    %v1811 = vld [vmem:[#allocation7 + $0x20] sm:$0xff]
    %v1812 = vld [vmem:[#allocation7 + $0x28] sm:$0xff]
    %v1813 = vld [vmem:[#allocation7 + $0x30] sm:$0xff]
    %v1814 = vld [vmem:[#allocation7 + $0x38] sm:$0xff]
    %v1815 = vld [vmem:[#allocation7 + $0x40] sm:$0xff]
    %v1816 = vld [vmem:[#allocation7 + $0x48] sm:$0xff]
    %v1817 = vld [vmem:[#allocation7 + $0x50] sm:$0xff]
    %v1818 = vld [vmem:[#allocation7 + $0x58] sm:$0xff]
    %v1819 = vld [vmem:[#allocation7 + $0x60] sm:$0xff]
    %v1820 = vld [vmem:[#allocation7 + $0x68] sm:$0xff]
    %v1821 = vld [vmem:[#allocation7 + $0x70] sm:$0xff]
    %v1822 = vld [vmem:[#allocation7 + $0x78] sm:$0xff]
    %v1823 = vld [vmem:[#allocation7 + $0x84] sm:$0x1]
    %v1824 = vlaneseq
    %v1825 = vshrl.u32 %v1824, 7
    %v1826 = vsub.s32 0, %v1825
    %v1827 = vrot.slane %v1823, %v1826
    %1828 = vmatprep.subr.mxu0 0.0
    %1829 = vmatpush1.msra.mxu0 %v1807
    %1830 = vmatprep.subr.mxu0 0.0
    %1831 = vmatpush1.msra.mxu0 %v1808
    %1832 = vmatprep.subr.mxu0 0.0
    %1833 = vmatpush1.msra.mxu0 %v1809
    %1834 = vmatprep.subr.mxu0 0.0
    %1835 = vmatpush1.msra.mxu0 %v1810
    %1836 = vmatprep.subr.mxu0 0.0
    %1837 = vmatpush1.msra.mxu0 %v1811
    %1838 = vmatprep.subr.mxu0 0.0
    %1839 = vmatpush1.msra.mxu0 %v1812
    %1840 = vmatprep.subr.mxu0 0.0
    %1841 = vmatpush1.msra.mxu0 %v1813
    %1842 = vmatprep.subr.mxu0 0.0
    %1843 = vmatpush1.msra.mxu0 %v1814
    %1844 = vmatprep.subr.mxu0 0.0
    %1845 = vmatpush1.msra.mxu0 %v1815
    %1846 = vmatprep.subr.mxu0 0.0
    %1847 = vmatpush1.msra.mxu0 %v1816
    %1848 = vmatprep.subr.mxu0 0.0
    %1849 = vmatpush1.msra.mxu0 %v1817
    %1850 = vmatprep.subr.mxu0 0.0
    %1851 = vmatpush1.msra.mxu0 %v1818
    %1852 = vmatprep.subr.mxu0 0.0
    %1853 = vmatpush1.msra.mxu0 %v1819
    %1854 = vmatprep.subr.mxu0 0.0
    %1855 = vmatpush1.msra.mxu0 %v1820
    %1856 = vmatprep.subr.mxu0 0.0
    %1857 = vmatpush1.msra.mxu0 %v1821
    %1858 = vmatprep.subr.mxu0 0.0
    %1859 = vmatpush1.msra.mxu0 %v1822
    %1860 = vmatprep.subr.mxu0 0.0
    %1861 = vmatpush1.msra.mxu0 0.0
    %1862 = vmatprep.subr.mxu0 0.0
    %1863 = vmatpush1.msra.mxu0 0.0
    %1864 = vmatprep.subr.mxu0 0.0
    %1865 = vmatpush1.msra.mxu0 0.0
    %1866 = vmatprep.subr.mxu0 0.0
    %1867 = vmatpush1.msra.mxu0 0.0
    %1868 = vmatprep.subr.mxu0 0.0
    %1869 = vmatpush1.msra.mxu0 0.0
    %1870 = vmatprep.subr.mxu0 0.0
    %1871 = vmatpush1.msra.mxu0 0.0
    %1872 = vmatprep.subr.mxu0 0.0
    %1873 = vmatpush1.msra.mxu0 0.0
    %1874 = vmatprep.subr.mxu0 0.0
    %1875 = vmatpush1.msra.mxu0 0.0
    %1876 = vmatprep.subr.mxu0 0.0
    %1877 = vmatpush1.msra.mxu0 0.0
    %1878 = vmatprep.subr.mxu0 0.0
    %1879 = vmatpush1.msra.mxu0 0.0
    %1880 = vmatprep.subr.mxu0 0.0
    %1881 = vmatpush1.msra.mxu0 0.0
    %1882 = vmatprep.subr.mxu0 0.0
    %1883 = vmatpush1.msra.mxu0 0.0
    %1884 = vmatprep.subr.mxu0 0.0
    %1885 = vmatpush1.msra.mxu0 0.0
    %1886 = vmatprep.subr.mxu0 0.0
    %1887 = vmatpush1.msra.mxu0 0.0
    %1888 = vmatprep.subr.mxu0 0.0
    %1889 = vmatpush1.msra.mxu0 0.0
    %1890 = vmatprep.subr.mxu0 0.0
    %1891 = vmatpush1.msra.mxu0 0.0
    %1892 = vmatprep.mubr.f32.mxu0 0.0
    %1893 = vmatmul.mubr.f32.gmra.mrb[0].mxu0 %v1806
    %v1894 = vpop.f32.mrb[0].mxu0
    %v1895 = vadd.f32 %v1827, %v1894
    %v1896 = vpop.f32.mrb[0].mxu0
    %1897 = vdwg.mxu0
    %1898 = vmax.xlane.f32.xlu0 %v1895
    %v1899 = vpop.xlane.xlu0 %1898
    %v1900 = vsub.f32 %v1895, %v1899
    %v1901 = vmul.f32 %v1900, 1.442695
    %v1902 = vpow.pop %v1901
    %1903 = vadd.xlane.f32.xlu0 %v1902
    %v1904 = vpop.xlane.xlu0 %1903
    %v1905 = vlog2.pop %v1904
    %v1906 = vmul.f32 %v1905, 0.6931472
    %v1907 = vadd.f32 %v1906, %v1899
    %v1908 = vsub.f32 %v1895, %v1907
    %1909 = vst [vmem:[#allocation8] sm:$0xff] %v1908
    // Predicated region
    $region26: #{tpu_custom_call.1} parent=1 // pred_check
      _
    $region27: #{tpu_custom_call.1} parent=1 // pred_check_branch
      %1911 = sbr.rel (0) target = $region29
    $region28: #{tpu_custom_call.1} parent=1 // pred_region
      %s1913 = ssub.s32 128, 128
      %1914 = vsyncadd [#allocation4], %s1913
      %s1916 = sshll.u32 [#allocation8], 4
      %s1917 = int_to_ptr.vmem [resolvable:$true] %s1916
      %1919 = dma.vmem_to_hbm [thread:$0]  %s1917, 128, %s3, [#allocation4]
    $region29: #{tpu_custom_call.1} parent=1 // pred_fallthru
      _
    // Predicated region
    $region30: #{tpu_custom_call.1} parent=1 // pred_check
      _
    $region31: #{tpu_custom_call.1} parent=1 // pred_check_branch
      %1921 = sbr.rel (0) target = $region33
    $region32: #{tpu_custom_call.1} parent=1 // pred_region
      %1922 = dma.done [#allocation4], 128
    $region33: #{tpu_custom_call.1} parent=1 // pred_fallthru
      _
    %1923 = vsyncpa [#allocation3], 1
    %1924 = vsyncpa [#allocation6], 1
    %1925 = vsyncpa [#allocation4], 1

</llo_original>
